<compile_context>
chip_gen: v7x
topology: tpu7x:2x2x1
jax: 0.10.0
libtpu: 0.0.40
codegen_flags: <defaults>
</compile_context>

<pallas_src>
import functools

import jax
import jax.numpy as jnp
from jax.experimental import pallas as pl
from jax.experimental.pallas import tpu as pltpu


# ----------------------------------------------------------------------------- kernel
def _mcvae_kernel(x_ref, wenc_ref, senc_ref, benc_ref,
                  wdec_ref, sdec_ref, bdec_ref, eps_ref, o_ref, *, latent):
    """One grid step = one block of `c_blk` channels, computed as batched matmuls.

    x_ref   : [C, B, Din]   bf16
    wenc_ref: [C, Din, 2L]  int8   (fused W_mu | W_logvar)
    senc_ref: [C, 1, 2L]    f32    per-column dequant scale
    benc_ref: [C, 1, 2L]    f32
    wdec_ref: [C, L, Dout]  int8
    sdec_ref: [C, 1, Dout]  f32
    bdec_ref: [C, 1, Dout]  bf16
    eps_ref : [C, B, L]     f32
    o_ref   : [C, B, Dout]  f32
    """
    # Dequantize the weight block once per grid step (int8 -> bf16 is exact); the
    # per-column scale is folded in after the f32 accumulation (linear in W).
    w_enc = wenc_ref[...].astype(jnp.bfloat16)                     # [C, Din, 2L]
    w_dec = wdec_ref[...].astype(jnp.bfloat16)                     # [C, L, Dout]

    # Encoder: fused fc_mu|fc_logvar, batched over the channel block (MXU, f32 acc).
    y = jnp.einsum('cbd,cdn->cbn', x_ref[...], w_enc,
                   preferred_element_type=jnp.float32)             # [C, B, 2L]
    y = y * senc_ref[...] + benc_ref[...]

    mu = y[..., :latent]
    log_var = y[..., latent:]
    z = mu + jnp.exp(0.5 * log_var) * eps_ref[...]                 # f32 reparam [C, B, L]

    # Decoder, batched over the channel block.
    rec = jnp.einsum('cbl,cln->cbn', z.astype(jnp.bfloat16), w_dec,
                     preferred_element_type=jnp.float32)           # [C, B, Dout]
    o_ref[...] = rec * sdec_ref[...] + bdec_ref[...]               # f32 output


# ------------------------------------------------------------------------- block sizing
def _round_up(n, m):
    return (n + m - 1) // m * m


def _per_channel_vmem_bytes(B, Din, two_L, L, Dout):
    """VMEM bytes one channel contributes to a grid step: double-buffered pipelined
    blocks (with (sublane, lane) padding) + single-buffered in-kernel temporaries."""
    sub8 = lambda n: _round_up(max(n, 1), 8)
    lane = lambda n: _round_up(max(n, 1), 128)
    blocks = (sub8(B) * lane(Din) * 2                 # x (bf16)
              + _round_up(Din, 32) * lane(two_L)      # w_enc (int8)
              + 2 * sub8(1) * lane(two_L) * 4         # s_enc, b_enc (f32)
              + _round_up(L, 32) * lane(Dout)         # w_dec (int8)
              + sub8(1) * lane(Dout) * 4              # s_dec (f32)
              + _round_up(1, 16) * lane(Dout) * 2     # b_dec (bf16)
              + sub8(B) * lane(L) * 4                 # eps (f32)
              + sub8(B) * lane(Dout) * 4)             # out (f32)
    scratch = (sub8(Din) * lane(two_L) * 2            # w_enc bf16 dequant copy
               + sub8(L) * lane(Dout) * 2             # w_dec bf16 dequant copy
               + sub8(B) * lane(two_L) * 4            # y
               + 2 * sub8(B) * lane(L) * 4            # mu / log_var / z
               + sub8(B) * lane(Dout) * 4)            # rec
    return 2 * blocks + scratch


def _pick_c_blk(NC, per_ch_bytes, budget_bytes):
    """Largest divisor of NC whose per-step VMEM fits the budget while keeping
    enough grid steps for pipelining / megacore sharding (>=2 small NC, >=4 large)."""
    divisors = [d for d in range(1, NC + 1) if NC % d == 0]
    fitting = [d for d in divisors if d * per_ch_bytes <= budget_bytes] or [1]
    min_steps = 2 if NC < 16 else 4
    staged = [d for d in fitting if NC // d >= min_steps]
    return max(staged) if staged else min(fitting)


# --------------------------------------------------------------------------- wrapper
def multi_channel_vae_forward(x, params, eps, *, c_blk=None,
                              vmem_budget_bytes=12 * 2**20):
    """x: [B, n_channels, in_channels, H, W] -> [B, n_channels, out_coils, H, W]."""
    B, NC, CIN, H, W = x.shape
    w_enc, s_enc, b_enc, w_dec, s_dec, b_dec = params
    _, Din, two_L = w_enc.shape
    L = two_L // 2
    Dout = w_dec.shape[-1]
    out_coils = Dout // (H * W)
    assert Din == CIN * H * W, (Din, CIN, H, W)

    per_ch = _per_channel_vmem_bytes(B, Din, two_L, L, Dout)
    if c_blk is None:
        c_blk = _pick_c_blk(NC, per_ch, vmem_budget_bytes)
    assert NC % c_blk == 0, (NC, c_blk)
    vmem_limit = int(min(64 * 2**20, max(16 * 2**20, c_blk * per_ch + (8 << 20))))

    # Channel-major bf16 activations: one fused transpose+cast XLA op (x is only a
    # few percent of the per-channel HBM bytes).
    x_cm = jnp.transpose(x.reshape(B, NC, Din), (1, 0, 2)).astype(jnp.bfloat16)

    flops = NC * (2 * B * Din * two_L + 2 * B * L * Dout)
    bytes_accessed = int(
        x_cm.size * x_cm.dtype.itemsize
        + w_enc.size * w_enc.dtype.itemsize + s_enc.size * s_enc.dtype.itemsize
        + b_enc.size * b_enc.dtype.itemsize
        + w_dec.size * w_dec.dtype.itemsize + s_dec.size * s_dec.dtype.itemsize
        + b_dec.size * b_dec.dtype.itemsize
        + eps.size * eps.dtype.itemsize
        + NC * B * Dout * 4)
    cost = pl.CostEstimate(flops=int(flops), transcendentals=int(NC * B * L),
                           bytes_accessed=bytes_accessed)

    cmap = lambda c: (c, 0, 0)
    out = pl.pallas_call(
        functools.partial(_mcvae_kernel, latent=L),
        out_shape=jax.ShapeDtypeStruct((NC, B, Dout), jnp.float32),
        grid_spec=pltpu.PrefetchScalarGridSpec(
            num_scalar_prefetch=0,
            grid=(NC // c_blk,),
            in_specs=[
                pl.BlockSpec((c_blk, B, Din), cmap),       # x            (bf16)
                pl.BlockSpec((c_blk, Din, two_L), cmap),   # W_mu|W_lv    (int8)
                pl.BlockSpec((c_blk, 1, two_L), cmap),     # enc scales   (f32)
                pl.BlockSpec((c_blk, 1, two_L), cmap),     # enc bias     (f32)
                pl.BlockSpec((c_blk, L, Dout), cmap),      # W_dec        (int8)
                pl.BlockSpec((c_blk, 1, Dout), cmap),      # dec scales   (f32)
                pl.BlockSpec((c_blk, 1, Dout), cmap),      # dec bias     (bf16)
                pl.BlockSpec((c_blk, B, L), cmap),         # eps          (f32)
            ],
            out_specs=pl.BlockSpec((c_blk, B, Dout), cmap),
        ),
        compiler_params=pltpu.CompilerParams(
            dimension_semantics=("parallel",),
            vmem_limit_bytes=vmem_limit),
        cost_estimate=cost,
    )(x_cm, w_enc, s_enc, b_enc, w_dec, s_dec, b_dec, eps)

    return jnp.transpose(out, (1, 0, 2)).reshape(B, NC, out_coils, H, W)


# ----------------------------------------------------------------------------- params
def _quantize_int8(w, axis):
    """Symmetric per-output-column int8 quantization along the contraction axis."""
    amax = jnp.max(jnp.abs(w), axis=axis, keepdims=True)
    scale = jnp.where(amax > 0, amax / 127.0, 1.0).astype(jnp.float32)
    q = jnp.clip(jnp.round(w / scale), -127.0, 127.0).astype(jnp.int8)
    return q, scale


def init_params(key, n_channels, in_channels, out_coils, latent_dim, H, W):
    Din = in_channels * H * W
    Dout = out_coils * H * W
    ks = jax.random.split(key, 6)
    scale_e = 1.0 / jnp.sqrt(Din)
    scale_d = 1.0 / jnp.sqrt(latent_dim)
    w_mu = scale_e * jax.random.normal(ks[0], (n_channels, Din, latent_dim), jnp.float32)
    b_mu = 0.01 * jax.random.normal(ks[1], (n_channels, 1, latent_dim), jnp.float32)
    w_lv = scale_e * jax.random.normal(ks[2], (n_channels, Din, latent_dim), jnp.float32)
    b_lv = 0.01 * jax.random.normal(ks[3], (n_channels, 1, latent_dim), jnp.float32)
    w_dec = scale_d * jax.random.normal(ks[4], (n_channels, latent_dim, Dout), jnp.float32)
    b_dec = 0.01 * jax.random.normal(ks[5], (n_channels, 1, Dout), jnp.float32)

    # Fuse fc_mu / fc_logvar once at init, then quantize to int8 + per-column scales
    # (the kernel is weight-DMA bound: weight bytes ~= wall clock).
    w_enc = jnp.concatenate([w_mu, w_lv], axis=-1)            # [NC, Din, 2L]
    b_enc = jnp.concatenate([b_mu, b_lv], axis=-1)            # [NC, 1, 2L]  f32
    w_enc_q, s_enc = _quantize_int8(w_enc, axis=1)            # int8, [NC,1,2L] f32
    w_dec_q, s_dec = _quantize_int8(w_dec, axis=1)            # int8, [NC,1,Dout] f32
    return (w_enc_q, s_enc, b_enc, w_dec_q, s_dec, b_dec.astype(jnp.bfloat16))


# -------------------------------------------------------------------------- reference
def reference_forward(x, params, eps):
    """Plain-JAX reference mirroring the kernel's int8-dequant / bf16 / f32-acc math."""
    B, NC, CIN, H, W = x.shape
    w_enc_q, s_enc, b_enc, w_dec_q, s_dec, b_dec = params
    two_L = w_enc_q.shape[-1]
    L = two_L // 2
    Dout = w_dec_q.shape[-1]
    out_coils = Dout // (H * W)
    Din = CIN * H * W

    xc = jnp.transpose(x.reshape(B, NC, Din), (1, 0, 2)).astype(jnp.bfloat16)
    y = jnp.einsum('cbd,cdn->cbn', xc, w_enc_q.astype(jnp.bfloat16),
                   preferred_element_type=jnp.float32) * s_enc + b_enc
    mu, log_var = y[..., :L], y[..., L:]
    z = mu + jnp.exp(0.5 * log_var) * eps
    rec = jnp.einsum('cbl,cln->cbn', z.astype(jnp.bfloat16),
                     w_dec_q.astype(jnp.bfloat16),
                     preferred_element_type=jnp.float32) * s_dec + b_dec.astype(jnp.float32)
    return jnp.transpose(rec, (1, 0, 2)).reshape(B, NC, out_coils, H, W)


# --------------------------------------------------------------------------------- main
if __name__ == "__main__":
    # Small shapes consistent with the module's forward.
    B, n_channels, in_channels, out_coils, latent_dim, H, W = 2, 4, 4, 4, 32, 16, 16

    key = jax.random.PRNGKey(0)
    k_x, k_p, k_eps = jax.random.split(key, 3)

    x = jax.random.normal(k_x, (B, n_channels, in_channels, H, W), jnp.float32)
    params = init_params(k_p, n_channels, in_channels, out_coils, latent_dim, H, W)
    eps = jax.random.normal(k_eps, (n_channels, B, latent_dim), jnp.float32)

    out = multi_channel_vae_forward(x, params, eps)
    out = jax.block_until_ready(out)

    ref = reference_forward(x, params, eps)
    assert out.shape == (B, n_channels, out_coils, H, W), out.shape
    max_err = float(jnp.max(jnp.abs(out - ref)))
    assert jnp.allclose(out, ref, atol=5e-3, rtol=5e-3), f"mismatch vs reference: {max_err}"

    print("KERNEL_OK")
</pallas_src>

<mosaic_0001>
module attributes {stable_mosaic.version = 11 : i64} {
  func.func @_mcvae_kernel(%arg0: i32, %arg1: memref<2x2x1024xbf16, #tpu.memory_space<vmem>>, %arg2: memref<2x1024x64xi8, #tpu.memory_space<vmem>>, %arg3: memref<2x1x64xf32, #tpu.memory_space<vmem>>, %arg4: memref<2x1x64xf32, #tpu.memory_space<vmem>>, %arg5: memref<2x32x1024xi8, #tpu.memory_space<vmem>>, %arg6: memref<2x1x1024xf32, #tpu.memory_space<vmem>>, %arg7: memref<2x1x1024xbf16, #tpu.memory_space<vmem>>, %arg8: memref<2x2x32xf32, #tpu.memory_space<vmem>>, %arg9: memref<2x2x1024xf32, #tpu.memory_space<vmem>>) attributes {dimension_semantics = [#tpu.dimension_semantics<parallel>], iteration_bounds = array<i64: 2>, scalar_prefetch = 0 : i64, scratch_operands = 0 : i64, tpu.core_type = #tpu.core_type<tc>, window_params = [{transform_indices = @transform_0, window_bounds = array<i64: 2, 2, 1024>}, {transform_indices = @transform_1, window_bounds = array<i64: 2, 1024, 64>}, {transform_indices = @transform_2, window_bounds = array<i64: 2, 1, 64>}, {transform_indices = @transform_3, window_bounds = array<i64: 2, 1, 64>}, {transform_indices = @transform_4, window_bounds = array<i64: 2, 32, 1024>}, {transform_indices = @transform_5, window_bounds = array<i64: 2, 1, 1024>}, {transform_indices = @transform_6, window_bounds = array<i64: 2, 1, 1024>}, {transform_indices = @transform_7, window_bounds = array<i64: 2, 2, 32>}, {transform_indices = @transform_8, window_bounds = array<i64: 2, 2, 1024>}]} {
    %c0 = arith.constant 0 : index
    %c0_0 = arith.constant 0 : index
    %c0_1 = arith.constant 0 : index
    %0 = vector.load %arg2[%c0, %c0_0, %c0_1] : memref<2x1024x64xi8, #tpu.memory_space<vmem>>, vector<2x1024x64xi8>
    %1 = arith.sitofp %0 : vector<2x1024x64xi8> to vector<2x1024x64xbf16>
    %c0_2 = arith.constant 0 : index
    %c0_3 = arith.constant 0 : index
    %c0_4 = arith.constant 0 : index
    %2 = vector.load %arg5[%c0_2, %c0_3, %c0_4] : memref<2x32x1024xi8, #tpu.memory_space<vmem>>, vector<2x32x1024xi8>
    %3 = arith.sitofp %2 : vector<2x32x1024xi8> to vector<2x32x1024xbf16>
    %c0_5 = arith.constant 0 : index
    %c0_6 = arith.constant 0 : index
    %c0_7 = arith.constant 0 : index
    %4 = vector.load %arg1[%c0_5, %c0_6, %c0_7] : memref<2x2x1024xbf16, #tpu.memory_space<vmem>>, vector<2x2x1024xbf16>
    "tpu.trace_start"() <{level = 10 : i32, message = "cbd,cdn->cbn"}> : () -> ()
    %cst = arith.constant dense<0.000000e+00> : vector<2x2x64xf32>
    %5 = tpu.matmul %4, %1, %cst {dimension_numbers = #tpu.dot_dimension_numbers<[2], [1], [1], [2], [0, 0, 0, 1, 1, 2], [0], [0]>} : vector<2x2x1024xbf16>, vector<2x1024x64xbf16>, vector<2x2x64xf32> -> vector<2x2x64xf32>
    "tpu.trace_stop"() : () -> ()
    %c0_8 = arith.constant 0 : index
    %c0_9 = arith.constant 0 : index
    %c0_10 = arith.constant 0 : index
    %6 = vector.load %arg3[%c0_8, %c0_9, %c0_10] : memref<2x1x64xf32, #tpu.memory_space<vmem>>, vector<2x1x64xf32>
    %7 = vector.broadcast %6 : vector<2x1x64xf32> to vector<2x2x64xf32>
    %8 = arith.mulf %5, %7 : vector<2x2x64xf32>
    %c0_11 = arith.constant 0 : index
    %c0_12 = arith.constant 0 : index
    %c0_13 = arith.constant 0 : index
    %9 = vector.load %arg4[%c0_11, %c0_12, %c0_13] : memref<2x1x64xf32, #tpu.memory_space<vmem>>, vector<2x1x64xf32>
    %10 = vector.broadcast %9 : vector<2x1x64xf32> to vector<2x2x64xf32>
    %11 = arith.addf %8, %10 : vector<2x2x64xf32>
    %12 = vector.extract_strided_slice %11 {offsets = [0, 0, 0], sizes = [2, 2, 32], strides = [1, 1, 1]} : vector<2x2x64xf32> to vector<2x2x32xf32>
    %13 = vector.extract_strided_slice %11 {offsets = [0, 0, 32], sizes = [2, 2, 32], strides = [1, 1, 1]} : vector<2x2x64xf32> to vector<2x2x32xf32>
    %cst_14 = arith.constant 5.000000e-01 : f32
    %14 = vector.broadcast %cst_14 : f32 to vector<2x2x32xf32>
    %15 = arith.mulf %14, %13 : vector<2x2x32xf32>
    %16 = math.exp %15 : vector<2x2x32xf32>
    %c0_15 = arith.constant 0 : index
    %c0_16 = arith.constant 0 : index
    %c0_17 = arith.constant 0 : index
    %17 = vector.load %arg8[%c0_15, %c0_16, %c0_17] : memref<2x2x32xf32, #tpu.memory_space<vmem>>, vector<2x2x32xf32>
    %18 = arith.mulf %16, %17 : vector<2x2x32xf32>
    %19 = arith.addf %12, %18 : vector<2x2x32xf32>
    %20 = arith.truncf %19 : vector<2x2x32xf32> to vector<2x2x32xbf16>
    "tpu.trace_start"() <{level = 10 : i32, message = "cbl,cln->cbn"}> : () -> ()
    %cst_18 = arith.constant dense<0.000000e+00> : vector<2x2x1024xf32>
    %21 = tpu.matmul %20, %3, %cst_18 {dimension_numbers = #tpu.dot_dimension_numbers<[2], [1], [1], [2], [0, 0, 0, 1, 1, 2], [0], [0]>} : vector<2x2x32xbf16>, vector<2x32x1024xbf16>, vector<2x2x1024xf32> -> vector<2x2x1024xf32>
    "tpu.trace_stop"() : () -> ()
    %c0_19 = arith.constant 0 : index
    %c0_20 = arith.constant 0 : index
    %c0_21 = arith.constant 0 : index
    %22 = vector.load %arg6[%c0_19, %c0_20, %c0_21] : memref<2x1x1024xf32, #tpu.memory_space<vmem>>, vector<2x1x1024xf32>
    %23 = vector.broadcast %22 : vector<2x1x1024xf32> to vector<2x2x1024xf32>
    %24 = arith.mulf %21, %23 : vector<2x2x1024xf32>
    %c0_22 = arith.constant 0 : index
    %c0_23 = arith.constant 0 : index
    %c0_24 = arith.constant 0 : index
    %25 = vector.load %arg7[%c0_22, %c0_23, %c0_24] : memref<2x1x1024xbf16, #tpu.memory_space<vmem>>, vector<2x1x1024xbf16>
    %26 = arith.extf %25 : vector<2x1x1024xbf16> to vector<2x1x1024xf32>
    %27 = vector.broadcast %26 : vector<2x1x1024xf32> to vector<2x2x1024xf32>
    %28 = arith.addf %24, %27 : vector<2x2x1024xf32>
    %c0_25 = arith.constant 0 : index
    %c0_26 = arith.constant 0 : index
    %c0_27 = arith.constant 0 : index
    %29 = vector.load %arg9[%c0_25, %c0_26, %c0_27] : memref<2x2x1024xf32, #tpu.memory_space<vmem>>, vector<2x2x1024xf32>
    tpu.vector_store %arg9[%c0_25, %c0_26, %c0_27], %28 {strides = array<i32>} : memref<2x2x1024xf32, #tpu.memory_space<vmem>>, vector<2x2x1024xf32>,
    return
  }
  func.func @transform_0(%arg0: i32) -> (i32, i32, i32) {
    %c0_i32 = arith.constant 0 : i32
    %c0_i32_0 = arith.constant 0 : i32
    %c0_i32_1 = arith.constant 0 : i32
    return %arg0, %c0_i32, %c0_i32_0 : i32, i32, i32
  }
  func.func @transform_1(%arg0: i32) -> (i32, i32, i32) {
    %c0_i32 = arith.constant 0 : i32
    %c0_i32_0 = arith.constant 0 : i32
    %c0_i32_1 = arith.constant 0 : i32
    return %arg0, %c0_i32, %c0_i32_0 : i32, i32, i32
  }
  func.func @transform_2(%arg0: i32) -> (i32, i32, i32) {
    %c0_i32 = arith.constant 0 : i32
    %c0_i32_0 = arith.constant 0 : i32
    %c0_i32_1 = arith.constant 0 : i32
    return %arg0, %c0_i32, %c0_i32_0 : i32, i32, i32
  }
  func.func @transform_3(%arg0: i32) -> (i32, i32, i32) {
    %c0_i32 = arith.constant 0 : i32
    %c0_i32_0 = arith.constant 0 : i32
    %c0_i32_1 = arith.constant 0 : i32
    return %arg0, %c0_i32, %c0_i32_0 : i32, i32, i32
  }
  func.func @transform_4(%arg0: i32) -> (i32, i32, i32) {
    %c0_i32 = arith.constant 0 : i32
    %c0_i32_0 = arith.constant 0 : i32
    %c0_i32_1 = arith.constant 0 : i32
    return %arg0, %c0_i32, %c0_i32_0 : i32, i32, i32
  }
  func.func @transform_5(%arg0: i32) -> (i32, i32, i32) {
    %c0_i32 = arith.constant 0 : i32
    %c0_i32_0 = arith.constant 0 : i32
    %c0_i32_1 = arith.constant 0 : i32
    return %arg0, %c0_i32, %c0_i32_0 : i32, i32, i32
  }
  func.func @transform_6(%arg0: i32) -> (i32, i32, i32) {
    %c0_i32 = arith.constant 0 : i32
    %c0_i32_0 = arith.constant 0 : i32
    %c0_i32_1 = arith.constant 0 : i32
    return %arg0, %c0_i32, %c0_i32_0 : i32, i32, i32
  }
  func.func @transform_7(%arg0: i32) -> (i32, i32, i32) {
    %c0_i32 = arith.constant 0 : i32
    %c0_i32_0 = arith.constant 0 : i32
    %c0_i32_1 = arith.constant 0 : i32
    return %arg0, %c0_i32, %c0_i32_0 : i32, i32, i32
  }
  func.func @transform_8(%arg0: i32) -> (i32, i32, i32) {
    %c0_i32 = arith.constant 0 : i32
    %c0_i32_0 = arith.constant 0 : i32
    %c0_i32_1 = arith.constant 0 : i32
    return %arg0, %c0_i32, %c0_i32_0 : i32, i32, i32
  }
}

</mosaic_0001>

<llo_original>
// kernel: tpu_custom_call.1
$region0: #{tpu_custom_call.1}
  #allocation0 [shape = 'u32[]', space=smem, size = 0x4, offset = 0x4, fixed_abs, tag = 'smem constant byte address 0x4 - core index']
  #allocation1 [shape = 'u32[144,128]{1,0:T(1,128)}', space=vmem, size = 0x12000, scoped, tag = 'internal scratch']
  %s0 = inlined_call_operand.vmem [shape: bf16[4,2,1024], index: 0, kind: input, shape index: {}]
  %s1 = inlined_call_operand.vmem [shape: s8[4,1024,64], index: 1, kind: input, shape index: {}]
  %s2 = inlined_call_operand.vmem [shape: f32[4,1,64], index: 2, kind: input, shape index: {}]
  %s3 = inlined_call_operand.vmem [shape: f32[4,1,64], index: 3, kind: input, shape index: {}]
  %s4 = inlined_call_operand.vmem [shape: s8[4,32,1024], index: 4, kind: input, shape index: {}]
  %s5 = inlined_call_operand.vmem [shape: f32[4,1,1024], index: 5, kind: input, shape index: {}]
  %s6 = inlined_call_operand.vmem [shape: bf16[4,1,1024], index: 6, kind: input, shape index: {}]
  %s7 = inlined_call_operand.vmem [shape: f32[4,2,32], index: 7, kind: input, shape index: {}]
  %s8 = inlined_call_operand.hbm [shape: f32[4,2,1024], index: 8, kind: output, shape index: {}]
  %s9 = sld [smem:[#allocation0]]
  $region65: #{tpu_custom_call.1} parent=0
    _
  %s11 = ssub.s32 1, %s9
  %s12 = scalar_select 0, %s11, %s9
  $region1: #{tpu_custom_call.1} parent=0
    #allocation2 [shape = 'u8[32768]{0}', space=vmem, size = 0x8000, scoped, tag = 'output window, operand 0']
    #allocation3 [shape = 's32[2]{0}', space=sflag, size = 0x8, scoped, tag = 'scoped memory for tpu_custom_call.1']
    %13 = vsyncpa [#allocation3], 0
    %s14 = scalar_lea.sflag [#allocation3], 1
    %15 = vsyncpa %s14, 0
    loop: start=0, step=1, limit=4
    $region2: #{tpu_custom_call.1} parent=1 // loop_pre_header
      _
    $region3: #{tpu_custom_call.1} parent=1 // loop_header
      %s17 = sphi 0, %s21
      %p18 = scmp.ge.s32.totalorder %s17, 4
      %s27 = sphi 0, %s29
      %s30 = sphi 0, %s27
      %s31 = sphi 0, %s30
      %s47 = sphi 0, %s31
      %s53 = sphi 0, %s55
      %s56 = sphi 0, %s53
      %s57 = sphi 0, %s56
      %s73 = sphi 0, %s57
      %s79 = sphi 0, %s81
      %s82 = sphi 0, %s79
      %s83 = sphi 0, %s82
      %s99 = sphi 0, %s83
      %s105 = sphi 0, %s107
      %s108 = sphi 0, %s105
      %s109 = sphi 0, %s108
      %s125 = sphi 0, %s109
      %s131 = sphi 0, %s133
      %s134 = sphi 0, %s131
      %s135 = sphi 0, %s134
      %s151 = sphi 0, %s135
      %s157 = sphi 0, %s159
      %s160 = sphi 0, %s157
      %s161 = sphi 0, %s160
      %s177 = sphi 0, %s161
      %s183 = sphi 0, %s185
      %s186 = sphi 0, %s183
      %s187 = sphi 0, %s186
      %s203 = sphi 0, %s187
      %s209 = sphi 0, %s211
      %s212 = sphi 0, %s209
      %s213 = sphi 0, %s212
      %s229 = sphi 0, %s213
      %s235 = sphi 0, %s237
      %s238 = sphi 0, %s235
      %s239 = sphi 0, %s238
      %s255 = sphi 0, %s239
    $region4: #{tpu_custom_call.1} parent=1 // loop_header_branch
      %20 = sbr.rel (%p18) target = $region8
    $region5: #{tpu_custom_call.1} parent=1 // loop_body
      %s22 = ssub.s32 %s17, 1
      %s23 = ssub.s32 %s17, 2
      %s24 = sadd.s32 %s17, 1
      %s25 = ssub.s32 %s17, %s24
      %p26 = scmp.eq.s32.totalorder %s25, 0
      %s28 = sadd.s32 %s27, 1
      %s29 = scalar_select %p26, %s27, %s28
      %p32 = pneg %p26
      %p33 = scmp.eq.s32.totalorder %s17, 1
      %p34 = por %p32, %p33
      %p35 = scmp.ne.s32.totalorder %s27, %s30
      %p36 = scmp.eq.s32.totalorder %s17, 0
      %p37 = por %p35, %p36
      %p38 = scmp.ne.s32.totalorder %s27, %s30
      %p39 = scmp.eq.s32.totalorder %s22, 1
      %p40 = por %p38, %p39
      %p41 = scmp.ne.s32.totalorder %s30, %s31
      %p42 = scmp.eq.s32.totalorder %s22, 0
      %p43 = por %p41, %p42
      %p44 = scmp.ne.s32.totalorder %s30, %s31
      %p45 = scmp.eq.s32.totalorder %s23, 1
      %p46 = por %p44, %p45
      %p48 = scmp.ne.s32.totalorder %s31, %s47
      %p49 = scmp.eq.s32.totalorder %s23, 0
      %p50 = por %p48, %p49
      %s51 = ssub.s32 %s17, %s24
      %p52 = scmp.eq.s32.totalorder %s51, 0
      %s54 = sadd.s32 %s53, 1
      %s55 = scalar_select %p52, %s53, %s54
      %p58 = pneg %p52
      %p59 = scmp.eq.s32.totalorder %s17, 1
      %p60 = por %p58, %p59
      %p61 = scmp.ne.s32.totalorder %s53, %s56
      %p62 = scmp.eq.s32.totalorder %s17, 0
      %p63 = por %p61, %p62
      %p64 = scmp.ne.s32.totalorder %s53, %s56
      %p65 = scmp.eq.s32.totalorder %s22, 1
      %p66 = por %p64, %p65
      %p67 = scmp.ne.s32.totalorder %s56, %s57
      %p68 = scmp.eq.s32.totalorder %s22, 0
      %p69 = por %p67, %p68
      %p70 = scmp.ne.s32.totalorder %s56, %s57
      %p71 = scmp.eq.s32.totalorder %s23, 1
      %p72 = por %p70, %p71
      %p74 = scmp.ne.s32.totalorder %s57, %s73
      %p75 = scmp.eq.s32.totalorder %s23, 0
      %p76 = por %p74, %p75
      %s77 = ssub.s32 %s17, %s24
      %p78 = scmp.eq.s32.totalorder %s77, 0
      %s80 = sadd.s32 %s79, 1
      %s81 = scalar_select %p78, %s79, %s80
      %p84 = pneg %p78
      %p85 = scmp.eq.s32.totalorder %s17, 1
      %p86 = por %p84, %p85
      %p87 = scmp.ne.s32.totalorder %s79, %s82
      %p88 = scmp.eq.s32.totalorder %s17, 0
      %p89 = por %p87, %p88
      %p90 = scmp.ne.s32.totalorder %s79, %s82
      %p91 = scmp.eq.s32.totalorder %s22, 1
      %p92 = por %p90, %p91
      %p93 = scmp.ne.s32.totalorder %s82, %s83
      %p94 = scmp.eq.s32.totalorder %s22, 0
      %p95 = por %p93, %p94
      %p96 = scmp.ne.s32.totalorder %s82, %s83
      %p97 = scmp.eq.s32.totalorder %s23, 1
      %p98 = por %p96, %p97
      %p100 = scmp.ne.s32.totalorder %s83, %s99
      %p101 = scmp.eq.s32.totalorder %s23, 0
      %p102 = por %p100, %p101
      %s103 = ssub.s32 %s17, %s24
      %p104 = scmp.eq.s32.totalorder %s103, 0
      %s106 = sadd.s32 %s105, 1
      %s107 = scalar_select %p104, %s105, %s106
      %p110 = pneg %p104
      %p111 = scmp.eq.s32.totalorder %s17, 1
      %p112 = por %p110, %p111
      %p113 = scmp.ne.s32.totalorder %s105, %s108
      %p114 = scmp.eq.s32.totalorder %s17, 0
      %p115 = por %p113, %p114
      %p116 = scmp.ne.s32.totalorder %s105, %s108
      %p117 = scmp.eq.s32.totalorder %s22, 1
      %p118 = por %p116, %p117
      %p119 = scmp.ne.s32.totalorder %s108, %s109
      %p120 = scmp.eq.s32.totalorder %s22, 0
      %p121 = por %p119, %p120
      %p122 = scmp.ne.s32.totalorder %s108, %s109
      %p123 = scmp.eq.s32.totalorder %s23, 1
      %p124 = por %p122, %p123
      %p126 = scmp.ne.s32.totalorder %s109, %s125
      %p127 = scmp.eq.s32.totalorder %s23, 0
      %p128 = por %p126, %p127
      %s129 = ssub.s32 %s17, %s24
      %p130 = scmp.eq.s32.totalorder %s129, 0
      %s132 = sadd.s32 %s131, 1
      %s133 = scalar_select %p130, %s131, %s132
      %p136 = pneg %p130
      %p137 = scmp.eq.s32.totalorder %s17, 1
      %p138 = por %p136, %p137
      %p139 = scmp.ne.s32.totalorder %s131, %s134
      %p140 = scmp.eq.s32.totalorder %s17, 0
      %p141 = por %p139, %p140
      %p142 = scmp.ne.s32.totalorder %s131, %s134
      %p143 = scmp.eq.s32.totalorder %s22, 1
      %p144 = por %p142, %p143
      %p145 = scmp.ne.s32.totalorder %s134, %s135
      %p146 = scmp.eq.s32.totalorder %s22, 0
      %p147 = por %p145, %p146
      %p148 = scmp.ne.s32.totalorder %s134, %s135
      %p149 = scmp.eq.s32.totalorder %s23, 1
      %p150 = por %p148, %p149
      %p152 = scmp.ne.s32.totalorder %s135, %s151
      %p153 = scmp.eq.s32.totalorder %s23, 0
      %p154 = por %p152, %p153
      %s155 = ssub.s32 %s17, %s24
      %p156 = scmp.eq.s32.totalorder %s155, 0
      %s158 = sadd.s32 %s157, 1
      %s159 = scalar_select %p156, %s157, %s158
      %p162 = pneg %p156
      %p163 = scmp.eq.s32.totalorder %s17, 1
      %p164 = por %p162, %p163
      %p165 = scmp.ne.s32.totalorder %s157, %s160
      %p166 = scmp.eq.s32.totalorder %s17, 0
      %p167 = por %p165, %p166
      %p168 = scmp.ne.s32.totalorder %s157, %s160
      %p169 = scmp.eq.s32.totalorder %s22, 1
      %p170 = por %p168, %p169
      %p171 = scmp.ne.s32.totalorder %s160, %s161
      %p172 = scmp.eq.s32.totalorder %s22, 0
      %p173 = por %p171, %p172
      %p174 = scmp.ne.s32.totalorder %s160, %s161
      %p175 = scmp.eq.s32.totalorder %s23, 1
      %p176 = por %p174, %p175
      %p178 = scmp.ne.s32.totalorder %s161, %s177
      %p179 = scmp.eq.s32.totalorder %s23, 0
      %p180 = por %p178, %p179
      %s181 = ssub.s32 %s17, %s24
      %p182 = scmp.eq.s32.totalorder %s181, 0
      %s184 = sadd.s32 %s183, 1
      %s185 = scalar_select %p182, %s183, %s184
      %p188 = pneg %p182
      %p189 = scmp.eq.s32.totalorder %s17, 1
      %p190 = por %p188, %p189
      %p191 = scmp.ne.s32.totalorder %s183, %s186
      %p192 = scmp.eq.s32.totalorder %s17, 0
      %p193 = por %p191, %p192
      %p194 = scmp.ne.s32.totalorder %s183, %s186
      %p195 = scmp.eq.s32.totalorder %s22, 1
      %p196 = por %p194, %p195
      %p197 = scmp.ne.s32.totalorder %s186, %s187
      %p198 = scmp.eq.s32.totalorder %s22, 0
      %p199 = por %p197, %p198
      %p200 = scmp.ne.s32.totalorder %s186, %s187
      %p201 = scmp.eq.s32.totalorder %s23, 1
      %p202 = por %p200, %p201
      %p204 = scmp.ne.s32.totalorder %s187, %s203
      %p205 = scmp.eq.s32.totalorder %s23, 0
      %p206 = por %p204, %p205
      %s207 = ssub.s32 %s17, %s24
      %p208 = scmp.eq.s32.totalorder %s207, 0
      %s210 = sadd.s32 %s209, 1
      %s211 = scalar_select %p208, %s209, %s210
      %p214 = pneg %p208
      %p215 = scmp.eq.s32.totalorder %s17, 1
      %p216 = por %p214, %p215
      %p217 = scmp.ne.s32.totalorder %s209, %s212
      %p218 = scmp.eq.s32.totalorder %s17, 0
      %p219 = por %p217, %p218
      %p220 = scmp.ne.s32.totalorder %s209, %s212
      %p221 = scmp.eq.s32.totalorder %s22, 1
      %p222 = por %p220, %p221
      %p223 = scmp.ne.s32.totalorder %s212, %s213
      %p224 = scmp.eq.s32.totalorder %s22, 0
      %p225 = por %p223, %p224
      %p226 = scmp.ne.s32.totalorder %s212, %s213
      %p227 = scmp.eq.s32.totalorder %s23, 1
      %p228 = por %p226, %p227
      %p230 = scmp.ne.s32.totalorder %s213, %s229
      %p231 = scmp.eq.s32.totalorder %s23, 0
      %p232 = por %p230, %p231
      %s233 = ssub.s32 %s17, %s24
      %p234 = scmp.eq.s32.totalorder %s233, 0
      %s236 = sadd.s32 %s235, 1
      %s237 = scalar_select %p234, %s235, %s236
      %p240 = pneg %p234
      %p241 = scmp.eq.s32.totalorder %s17, 1
      %p242 = por %p240, %p241
      %p243 = scmp.ne.s32.totalorder %s235, %s238
      %p244 = scmp.eq.s32.totalorder %s17, 0
      %p245 = por %p243, %p244
      %p246 = scmp.ne.s32.totalorder %s235, %s238
      %p247 = scmp.eq.s32.totalorder %s22, 1
      %p248 = por %p246, %p247
      %p249 = scmp.ne.s32.totalorder %s238, %s239
      %p250 = scmp.eq.s32.totalorder %s22, 0
      %p251 = por %p249, %p250
      %p252 = scmp.ne.s32.totalorder %s238, %s239
      %p253 = scmp.eq.s32.totalorder %s23, 1
      %p254 = por %p252, %p253
      %p256 = scmp.ne.s32.totalorder %s239, %s255
      %p257 = scmp.eq.s32.totalorder %s23, 0
      %p258 = por %p256, %p257
      %p259 = scmp.le.s32.totalorder 1, %s17
      %p260 = scmp.lt.s32.totalorder %s17, 3
      %p261 = pnand %p259, %p260
      %p262 = pneg %p261
      // Predicated region
      $region9: #{tpu_custom_call.1} parent=5 // pred_check
        _
      $region10: #{tpu_custom_call.1} parent=5 // pred_check_branch
        %264 = sbr.rel (%p261) target = $region12
      $region11: #{tpu_custom_call.1} parent=5 // pred_region
        %s265 = ssub.s32 %s17, 1
      $region12: #{tpu_custom_call.1} parent=5 // pred_fallthru
        _
      %p266 = scmp.lt.s32.totalorder %s17, 2
      // Predicated region
      $region13: #{tpu_custom_call.1} parent=5 // pred_check
        %p267 = pneg %p266
      $region14: #{tpu_custom_call.1} parent=5 // pred_check_branch
        %269 = sbr.rel (%p267) target = $region16
      $region15: #{tpu_custom_call.1} parent=5 // pred_region
        // Predicated region
        $region17: #{tpu_custom_call.1} parent=15 // pred_check
          %p270 = pneg %p37
        $region18: #{tpu_custom_call.1} parent=15 // pred_check_branch
          %272 = sbr.rel (%p270) target = $region20
        $region19: #{tpu_custom_call.1} parent=15 // pred_region
          %s273 = smul.u32 2, %s17
          %p274 = scmp.lt.s32.totalorder %s273, 3
          %s275 = scalar_select %p274, %s273, 3
          %s276 = smul.addr %s275, 8
          %s277 = scalar_lea.vmem %s0, %s276
          %s278 = smul.u32 2, %s17
        $region20: #{tpu_custom_call.1} parent=15 // pred_fallthru
          _
        // Predicated region
        $region21: #{tpu_custom_call.1} parent=15 // pred_check
          %p279 = pneg %p63
        $region22: #{tpu_custom_call.1} parent=15 // pred_check_branch
          %281 = sbr.rel (%p279) target = $region24
        $region23: #{tpu_custom_call.1} parent=15 // pred_region
          %s282 = smul.u32 2, %s17
          %p283 = scmp.lt.s32.totalorder %s282, 3
          %s284 = scalar_select %p283, %s282, 3
          %s285 = smul.addr %s284, 32
          %s286 = smul.addr %s285, 8
          %s287 = scalar_lea.vmem %s1, %s286
          %s288 = smul.u32 2, %s17
        $region24: #{tpu_custom_call.1} parent=15 // pred_fallthru
          _
        // Predicated region
        $region25: #{tpu_custom_call.1} parent=15 // pred_check
          %p289 = pneg %p89
        $region26: #{tpu_custom_call.1} parent=15 // pred_check_branch
          %291 = sbr.rel (%p289) target = $region28
        $region27: #{tpu_custom_call.1} parent=15 // pred_region
          %s292 = smul.u32 2, %s17
          %p293 = scmp.lt.s32.totalorder %s292, 3
          %s294 = scalar_select %p293, %s292, 3
          %s295 = scalar_lea.vmem %s2, %s294
          %s296 = smul.u32 2, %s17
        $region28: #{tpu_custom_call.1} parent=15 // pred_fallthru
          _
        // Predicated region
        $region29: #{tpu_custom_call.1} parent=15 // pred_check
          %p297 = pneg %p115
        $region30: #{tpu_custom_call.1} parent=15 // pred_check_branch
          %299 = sbr.rel (%p297) target = $region32
        $region31: #{tpu_custom_call.1} parent=15 // pred_region
          %s300 = smul.u32 2, %s17
          %p301 = scmp.lt.s32.totalorder %s300, 3
          %s302 = scalar_select %p301, %s300, 3
          %s303 = scalar_lea.vmem %s3, %s302
          %s304 = smul.u32 2, %s17
        $region32: #{tpu_custom_call.1} parent=15 // pred_fallthru
          _
        // Predicated region
        $region33: #{tpu_custom_call.1} parent=15 // pred_check
          %p305 = pneg %p141
        $region34: #{tpu_custom_call.1} parent=15 // pred_check_branch
          %307 = sbr.rel (%p305) target = $region36
        $region35: #{tpu_custom_call.1} parent=15 // pred_region
          %s308 = smul.u32 2, %s17
          %p309 = scmp.lt.s32.totalorder %s308, 3
          %s310 = scalar_select %p309, %s308, 3
          %s311 = smul.addr %s310, 8
          %s312 = smul.addr %s311, 8
          %s313 = scalar_lea.vmem %s4, %s312
          %s314 = smul.u32 2, %s17
        $region36: #{tpu_custom_call.1} parent=15 // pred_fallthru
          _
        // Predicated region
        $region37: #{tpu_custom_call.1} parent=15 // pred_check
          %p315 = pneg %p167
        $region38: #{tpu_custom_call.1} parent=15 // pred_check_branch
          %317 = sbr.rel (%p315) target = $region40
        $region39: #{tpu_custom_call.1} parent=15 // pred_region
          %s318 = smul.u32 2, %s17
          %p319 = scmp.lt.s32.totalorder %s318, 3
          %s320 = scalar_select %p319, %s318, 3
          %s321 = smul.addr %s320, 8
          %s322 = scalar_lea.vmem %s5, %s321
          %s323 = smul.u32 2, %s17
        $region40: #{tpu_custom_call.1} parent=15 // pred_fallthru
          _
        // Predicated region
        $region41: #{tpu_custom_call.1} parent=15 // pred_check
          %p324 = pneg %p193
        $region42: #{tpu_custom_call.1} parent=15 // pred_check_branch
          %326 = sbr.rel (%p324) target = $region44
        $region43: #{tpu_custom_call.1} parent=15 // pred_region
          %s327 = smul.u32 2, %s17
          %p328 = scmp.lt.s32.totalorder %s327, 3
          %s329 = scalar_select %p328, %s327, 3
          %s330 = smul.addr %s329, 8
          %s331 = scalar_lea.vmem %s6, %s330
          %s332 = smul.u32 2, %s17
        $region44: #{tpu_custom_call.1} parent=15 // pred_fallthru
          _
        // Predicated region
        $region45: #{tpu_custom_call.1} parent=15 // pred_check
          %p333 = pneg %p219
        $region46: #{tpu_custom_call.1} parent=15 // pred_check_branch
          %335 = sbr.rel (%p333) target = $region48
        $region47: #{tpu_custom_call.1} parent=15 // pred_region
          %s336 = smul.u32 2, %s17
          %p337 = scmp.lt.s32.totalorder %s336, 3
          %s338 = scalar_select %p337, %s336, 3
          %s339 = smul.addr %s338, 2
          %s340 = scalar_lea.vmem %s7, %s339
          %s341 = smul.u32 2, %s17
        $region48: #{tpu_custom_call.1} parent=15 // pred_fallthru
          _
      $region16: #{tpu_custom_call.1} parent=5 // pred_fallthru
        _
      %p342 = scmp.le.s32.totalorder 1, %s17
      %p343 = scmp.lt.s32.totalorder %s17, 3
      %p344 = pnand %p342, %p343
      %p345 = pneg %p344
      // Predicated region
      $region49: #{tpu_custom_call.1} parent=5 // pred_check
        _
      $region50: #{tpu_custom_call.1} parent=5 // pred_check_branch
        %347 = sbr.rel (%p344) target = $region52
      $region51: #{tpu_custom_call.1} parent=5 // pred_region
        %s348 = ssub.s32 %s17, 1
        %s349 = smul.u32 2, %s22
        %p350 = scmp.lt.s32.totalorder %s349, 3
        %s351 = scalar_select %p350, %s349, 3
        %s352 = smul.addr %s351, 8
        %s353 = scalar_lea.vmem %s0, %s352
        %p354 = pneg %p43
        %p355 = pneg %p40
        %s356 = smul.u32 2, %s22
        %p357 = scmp.lt.s32.totalorder %s356, 3
        %s358 = scalar_select %p357, %s356, 3
        %s359 = smul.addr %s358, 32
        %s360 = smul.addr %s359, 8
        %s361 = scalar_lea.vmem %s1, %s360
        %p362 = pneg %p69
        %p363 = pneg %p66
        %s364 = smul.u32 2, %s22
        %p365 = scmp.lt.s32.totalorder %s364, 3
        %s366 = scalar_select %p365, %s364, 3
        %s367 = scalar_lea.vmem %s2, %s366
        %p368 = pneg %p95
        %p369 = pneg %p92
        %s370 = smul.u32 2, %s22
        %p371 = scmp.lt.s32.totalorder %s370, 3
        %s372 = scalar_select %p371, %s370, 3
        %s373 = scalar_lea.vmem %s3, %s372
        %p374 = pneg %p121
        %p375 = pneg %p118
        %s376 = smul.u32 2, %s22
        %p377 = scmp.lt.s32.totalorder %s376, 3
        %s378 = scalar_select %p377, %s376, 3
        %s379 = smul.addr %s378, 8
        %s380 = smul.addr %s379, 8
        %s381 = scalar_lea.vmem %s4, %s380
        %p382 = pneg %p147
        %p383 = pneg %p144
        %s384 = smul.u32 2, %s22
        %p385 = scmp.lt.s32.totalorder %s384, 3
        %s386 = scalar_select %p385, %s384, 3
        %s387 = smul.addr %s386, 8
        %s388 = scalar_lea.vmem %s5, %s387
        %p389 = pneg %p173
        %p390 = pneg %p170
        %s391 = smul.u32 2, %s22
        %p392 = scmp.lt.s32.totalorder %s391, 3
        %s393 = scalar_select %p392, %s391, 3
        %s394 = smul.addr %s393, 8
        %s395 = scalar_lea.vmem %s6, %s394
        %p396 = pneg %p199
        %p397 = pneg %p196
        %s398 = smul.u32 2, %s22
        %p399 = scmp.lt.s32.totalorder %s398, 3
        %s400 = scalar_select %p399, %s398, 3
        %s401 = smul.addr %s400, 2
        %s402 = scalar_lea.vmem %s7, %s401
        %p403 = pneg %p225
        %p404 = pneg %p222
        %p405 = pneg %p251
        %p406 = pneg %p248
        %s407 = sand.u32 %s238, 1
        %s408 = scalar_lea.sflag [#allocation3], %s407
        %s409 = sand.u32 %s238, 1
        %s410 = smul.addr %s409, 32
        %s411 = scalar_lea.vmem [#allocation2], %s410
        %s412 = smul.u32 2, %s22
        %p413 = scmp.lt.s32.totalorder %s412, 3
        %s414 = scalar_select %p413, %s412, 3
        %s415 = smul.addr %s414, 8
        %s416 = scalar_lea.vmem %s0, %s415
        %s417 = smul.u32 2, %s22
        %s418 = smul.u32 2, %s22
        %p419 = scmp.lt.s32.totalorder %s418, 3
        %s420 = scalar_select %p419, %s418, 3
        %s421 = smul.addr %s420, 32
        %s422 = smul.addr %s421, 8
        %s423 = scalar_lea.vmem %s1, %s422
        %s424 = smul.u32 2, %s22
        %s425 = smul.u32 2, %s22
        %p426 = scmp.lt.s32.totalorder %s425, 3
        %s427 = scalar_select %p426, %s425, 3
        %s428 = scalar_lea.vmem %s2, %s427
        %s429 = smul.u32 2, %s22
        %s430 = smul.u32 2, %s22
        %p431 = scmp.lt.s32.totalorder %s430, 3
        %s432 = scalar_select %p431, %s430, 3
        %s433 = scalar_lea.vmem %s3, %s432
        %s434 = smul.u32 2, %s22
        %s435 = smul.u32 2, %s22
        %p436 = scmp.lt.s32.totalorder %s435, 3
        %s437 = scalar_select %p436, %s435, 3
        %s438 = smul.addr %s437, 8
        %s439 = smul.addr %s438, 8
        %s440 = scalar_lea.vmem %s4, %s439
        %s441 = smul.u32 2, %s22
        %s442 = smul.u32 2, %s22
        %p443 = scmp.lt.s32.totalorder %s442, 3
        %s444 = scalar_select %p443, %s442, 3
        %s445 = smul.addr %s444, 8
        %s446 = scalar_lea.vmem %s5, %s445
        %s447 = smul.u32 2, %s22
        %s448 = smul.u32 2, %s22
        %p449 = scmp.lt.s32.totalorder %s448, 3
        %s450 = scalar_select %p449, %s448, 3
        %s451 = smul.addr %s450, 8
        %s452 = scalar_lea.vmem %s6, %s451
        %s453 = smul.u32 2, %s22
        %s454 = smul.u32 2, %s22
        %p455 = scmp.lt.s32.totalorder %s454, 3
        %s456 = scalar_select %p455, %s454, 3
        %s457 = smul.addr %s456, 2
        %s458 = scalar_lea.vmem %s7, %s457
        %s459 = smul.u32 2, %s22
        %s460 = smul.u32 2, %s22
        %v462 = vld [vmem:[%s423] sm:$0xff]
        %v463 = vld [vmem:[%s423 + $0x8] sm:$0xff]
        %v464 = vld [vmem:[%s423 + $0x10] sm:$0xff]
        %v465 = vld [vmem:[%s423 + $0x18] sm:$0xff]
        %v466 = vld [vmem:[%s423 + $0x20] sm:$0xff]
        %v467 = vld [vmem:[%s423 + $0x28] sm:$0xff]
        %v468 = vld [vmem:[%s423 + $0x30] sm:$0xff]
        %v469 = vld [vmem:[%s423 + $0x38] sm:$0xff]
        %v470 = vld [vmem:[%s423 + $0x40] sm:$0xff]
        %v471 = vld [vmem:[%s423 + $0x48] sm:$0xff]
        %v472 = vld [vmem:[%s423 + $0x50] sm:$0xff]
        %v473 = vld [vmem:[%s423 + $0x58] sm:$0xff]
        %v474 = vld [vmem:[%s423 + $0x60] sm:$0xff]
        %v475 = vld [vmem:[%s423 + $0x68] sm:$0xff]
        %v476 = vld [vmem:[%s423 + $0x70] sm:$0xff]
        %v477 = vld [vmem:[%s423 + $0x78] sm:$0xff]
        %v478 = vld [vmem:[%s423 + $0x80] sm:$0xff]
        %v479 = vld [vmem:[%s423 + $0x88] sm:$0xff]
        %v480 = vld [vmem:[%s423 + $0x90] sm:$0xff]
        %v481 = vld [vmem:[%s423 + $0x98] sm:$0xff]
        %v482 = vld [vmem:[%s423 + $0xa0] sm:$0xff]
        %v483 = vld [vmem:[%s423 + $0xa8] sm:$0xff]
        %v484 = vld [vmem:[%s423 + $0xb0] sm:$0xff]
        %v485 = vld [vmem:[%s423 + $0xb8] sm:$0xff]
        %v486 = vld [vmem:[%s423 + $0xc0] sm:$0xff]
        %v487 = vld [vmem:[%s423 + $0xc8] sm:$0xff]
        %v488 = vld [vmem:[%s423 + $0xd0] sm:$0xff]
        %v489 = vld [vmem:[%s423 + $0xd8] sm:$0xff]
        %v490 = vld [vmem:[%s423 + $0xe0] sm:$0xff]
        %v491 = vld [vmem:[%s423 + $0xe8] sm:$0xff]
        %v492 = vld [vmem:[%s423 + $0xf0] sm:$0xff]
        %v493 = vld [vmem:[%s423 + $0xf8] sm:$0xff]
        %v494 = vld [vmem:[%s423 + $0x100] sm:$0xff]
        %v495 = vld [vmem:[%s423 + $0x108] sm:$0xff]
        %v496 = vld [vmem:[%s423 + $0x110] sm:$0xff]
        %v497 = vld [vmem:[%s423 + $0x118] sm:$0xff]
        %v498 = vld [vmem:[%s423 + $0x120] sm:$0xff]
        %v499 = vld [vmem:[%s423 + $0x128] sm:$0xff]
        %v500 = vld [vmem:[%s423 + $0x130] sm:$0xff]
        %v501 = vld [vmem:[%s423 + $0x138] sm:$0xff]
        %v502 = vld [vmem:[%s423 + $0x140] sm:$0xff]
        %v503 = vld [vmem:[%s423 + $0x148] sm:$0xff]
        %v504 = vld [vmem:[%s423 + $0x150] sm:$0xff]
        %v505 = vld [vmem:[%s423 + $0x158] sm:$0xff]
        %v506 = vld [vmem:[%s423 + $0x160] sm:$0xff]
        %v507 = vld [vmem:[%s423 + $0x168] sm:$0xff]
        %v508 = vld [vmem:[%s423 + $0x170] sm:$0xff]
        %v509 = vld [vmem:[%s423 + $0x178] sm:$0xff]
        %v510 = vld [vmem:[%s423 + $0x180] sm:$0xff]
        %v511 = vld [vmem:[%s423 + $0x188] sm:$0xff]
        %v512 = vld [vmem:[%s423 + $0x190] sm:$0xff]
        %v513 = vld [vmem:[%s423 + $0x198] sm:$0xff]
        %v514 = vld [vmem:[%s423 + $0x1a0] sm:$0xff]
        %v515 = vld [vmem:[%s423 + $0x1a8] sm:$0xff]
        %v516 = vld [vmem:[%s423 + $0x1b0] sm:$0xff]
        %v517 = vld [vmem:[%s423 + $0x1b8] sm:$0xff]
        %v518 = vld [vmem:[%s423 + $0x1c0] sm:$0xff]
        %v519 = vld [vmem:[%s423 + $0x1c8] sm:$0xff]
        %v520 = vld [vmem:[%s423 + $0x1d0] sm:$0xff]
        %v521 = vld [vmem:[%s423 + $0x1d8] sm:$0xff]
        %v522 = vld [vmem:[%s423 + $0x1e0] sm:$0xff]
        %v523 = vld [vmem:[%s423 + $0x1e8] sm:$0xff]
        %v524 = vld [vmem:[%s423 + $0x1f0] sm:$0xff]
        %v525 = vld [vmem:[%s423 + $0x1f8] sm:$0xff]
        %v526 = vunpack.c.l.s8.bf16 %v462
        %v527 = vunpack.c.h.s8.bf16 %v462
        %v528 = vunpack.c.l.s8.bf16 %v463
        %v529 = vunpack.c.h.s8.bf16 %v463
        %v530 = vunpack.c.l.s8.bf16 %v464
        %v531 = vunpack.c.h.s8.bf16 %v464
        %v532 = vunpack.c.l.s8.bf16 %v465
        %v533 = vunpack.c.h.s8.bf16 %v465
        %v534 = vunpack.c.l.s8.bf16 %v466
        %v535 = vunpack.c.h.s8.bf16 %v466
        %v536 = vunpack.c.l.s8.bf16 %v467
        %v537 = vunpack.c.h.s8.bf16 %v467
        %v538 = vunpack.c.l.s8.bf16 %v468
        %v539 = vunpack.c.h.s8.bf16 %v468
        %v540 = vunpack.c.l.s8.bf16 %v469
        %v541 = vunpack.c.h.s8.bf16 %v469
        %v542 = vunpack.c.l.s8.bf16 %v470
        %v543 = vunpack.c.h.s8.bf16 %v470
        %v544 = vunpack.c.l.s8.bf16 %v471
        %v545 = vunpack.c.h.s8.bf16 %v471
        %v546 = vunpack.c.l.s8.bf16 %v472
        %v547 = vunpack.c.h.s8.bf16 %v472
        %v548 = vunpack.c.l.s8.bf16 %v473
        %v549 = vunpack.c.h.s8.bf16 %v473
        %v550 = vunpack.c.l.s8.bf16 %v474
        %v551 = vunpack.c.h.s8.bf16 %v474
        %v552 = vunpack.c.l.s8.bf16 %v475
        %v553 = vunpack.c.h.s8.bf16 %v475
        %v554 = vunpack.c.l.s8.bf16 %v476
        %v555 = vunpack.c.h.s8.bf16 %v476
        %v556 = vunpack.c.l.s8.bf16 %v477
        %v557 = vunpack.c.h.s8.bf16 %v477
        %v558 = vunpack.c.l.s8.bf16 %v478
        %v559 = vunpack.c.h.s8.bf16 %v478
        %v560 = vunpack.c.l.s8.bf16 %v479
        %v561 = vunpack.c.h.s8.bf16 %v479
        %v562 = vunpack.c.l.s8.bf16 %v480
        %v563 = vunpack.c.h.s8.bf16 %v480
        %v564 = vunpack.c.l.s8.bf16 %v481
        %v565 = vunpack.c.h.s8.bf16 %v481
        %v566 = vunpack.c.l.s8.bf16 %v482
        %v567 = vunpack.c.h.s8.bf16 %v482
        %v568 = vunpack.c.l.s8.bf16 %v483
        %v569 = vunpack.c.h.s8.bf16 %v483
        %v570 = vunpack.c.l.s8.bf16 %v484
        %v571 = vunpack.c.h.s8.bf16 %v484
        %v572 = vunpack.c.l.s8.bf16 %v485
        %v573 = vunpack.c.h.s8.bf16 %v485
        %v574 = vunpack.c.l.s8.bf16 %v486
        %v575 = vunpack.c.h.s8.bf16 %v486
        %v576 = vunpack.c.l.s8.bf16 %v487
        %v577 = vunpack.c.h.s8.bf16 %v487
        %v578 = vunpack.c.l.s8.bf16 %v488
        %v579 = vunpack.c.h.s8.bf16 %v488
        %v580 = vunpack.c.l.s8.bf16 %v489
        %v581 = vunpack.c.h.s8.bf16 %v489
        %v582 = vunpack.c.l.s8.bf16 %v490
        %v583 = vunpack.c.h.s8.bf16 %v490
        %v584 = vunpack.c.l.s8.bf16 %v491
        %v585 = vunpack.c.h.s8.bf16 %v491
        %v586 = vunpack.c.l.s8.bf16 %v492
        %v587 = vunpack.c.h.s8.bf16 %v492
        %v588 = vunpack.c.l.s8.bf16 %v493
        %v589 = vunpack.c.h.s8.bf16 %v493
        %v590 = vunpack.c.l.s8.bf16 %v494
        %v591 = vunpack.c.h.s8.bf16 %v494
        %v592 = vunpack.c.l.s8.bf16 %v495
        %v593 = vunpack.c.h.s8.bf16 %v495
        %v594 = vunpack.c.l.s8.bf16 %v496
        %v595 = vunpack.c.h.s8.bf16 %v496
        %v596 = vunpack.c.l.s8.bf16 %v497
        %v597 = vunpack.c.h.s8.bf16 %v497
        %v598 = vunpack.c.l.s8.bf16 %v498
        %v599 = vunpack.c.h.s8.bf16 %v498
        %v600 = vunpack.c.l.s8.bf16 %v499
        %v601 = vunpack.c.h.s8.bf16 %v499
        %v602 = vunpack.c.l.s8.bf16 %v500
        %v603 = vunpack.c.h.s8.bf16 %v500
        %v604 = vunpack.c.l.s8.bf16 %v501
        %v605 = vunpack.c.h.s8.bf16 %v501
        %v606 = vunpack.c.l.s8.bf16 %v502
        %v607 = vunpack.c.h.s8.bf16 %v502
        %v608 = vunpack.c.l.s8.bf16 %v503
        %v609 = vunpack.c.h.s8.bf16 %v503
        %v610 = vunpack.c.l.s8.bf16 %v504
        %v611 = vunpack.c.h.s8.bf16 %v504
        %v612 = vunpack.c.l.s8.bf16 %v505
        %v613 = vunpack.c.h.s8.bf16 %v505
        %v614 = vunpack.c.l.s8.bf16 %v506
        %v615 = vunpack.c.h.s8.bf16 %v506
        %v616 = vunpack.c.l.s8.bf16 %v507
        %v617 = vunpack.c.h.s8.bf16 %v507
        %v618 = vunpack.c.l.s8.bf16 %v508
        %v619 = vunpack.c.h.s8.bf16 %v508
        %v620 = vunpack.c.l.s8.bf16 %v509
        %v621 = vunpack.c.h.s8.bf16 %v509
        %v622 = vunpack.c.l.s8.bf16 %v510
        %v623 = vunpack.c.h.s8.bf16 %v510
        %v624 = vunpack.c.l.s8.bf16 %v511
        %v625 = vunpack.c.h.s8.bf16 %v511
        %v626 = vunpack.c.l.s8.bf16 %v512
        %v627 = vunpack.c.h.s8.bf16 %v512
        %v628 = vunpack.c.l.s8.bf16 %v513
        %v629 = vunpack.c.h.s8.bf16 %v513
        %v630 = vunpack.c.l.s8.bf16 %v514
        %v631 = vunpack.c.h.s8.bf16 %v514
        %v632 = vunpack.c.l.s8.bf16 %v515
        %v633 = vunpack.c.h.s8.bf16 %v515
        %v634 = vunpack.c.l.s8.bf16 %v516
        %v635 = vunpack.c.h.s8.bf16 %v516
        %v636 = vunpack.c.l.s8.bf16 %v517
        %v637 = vunpack.c.h.s8.bf16 %v517
        %v638 = vunpack.c.l.s8.bf16 %v518
        %v639 = vunpack.c.h.s8.bf16 %v518
        %v640 = vunpack.c.l.s8.bf16 %v519
        %v641 = vunpack.c.h.s8.bf16 %v519
        %v642 = vunpack.c.l.s8.bf16 %v520
        %v643 = vunpack.c.h.s8.bf16 %v520
        %v644 = vunpack.c.l.s8.bf16 %v521
        %v645 = vunpack.c.h.s8.bf16 %v521
        %v646 = vunpack.c.l.s8.bf16 %v522
        %v647 = vunpack.c.h.s8.bf16 %v522
        %v648 = vunpack.c.l.s8.bf16 %v523
        %v649 = vunpack.c.h.s8.bf16 %v523
        %v650 = vunpack.c.l.s8.bf16 %v524
        %v651 = vunpack.c.h.s8.bf16 %v524
        %v652 = vunpack.c.l.s8.bf16 %v525
        %v653 = vunpack.c.h.s8.bf16 %v525
        %v654 = vld [vmem:[%s440] sm:$0xff]
        %v655 = vld [vmem:[%s440 + $0x8] sm:$0xff]
        %v656 = vld [vmem:[%s440 + $0x10] sm:$0xff]
        %v657 = vld [vmem:[%s440 + $0x18] sm:$0xff]
        %v658 = vld [vmem:[%s440 + $0x20] sm:$0xff]
        %v659 = vld [vmem:[%s440 + $0x28] sm:$0xff]
        %v660 = vld [vmem:[%s440 + $0x30] sm:$0xff]
        %v661 = vld [vmem:[%s440 + $0x38] sm:$0xff]
        %v662 = vld [vmem:[%s440 + $0x40] sm:$0xff]
        %v663 = vld [vmem:[%s440 + $0x48] sm:$0xff]
        %v664 = vld [vmem:[%s440 + $0x50] sm:$0xff]
        %v665 = vld [vmem:[%s440 + $0x58] sm:$0xff]
        %v666 = vld [vmem:[%s440 + $0x60] sm:$0xff]
        %v667 = vld [vmem:[%s440 + $0x68] sm:$0xff]
        %v668 = vld [vmem:[%s440 + $0x70] sm:$0xff]
        %v669 = vld [vmem:[%s440 + $0x78] sm:$0xff]
        %v670 = vunpack.c.l.s8.bf16 %v654
        %v671 = vunpack.c.l.s8.bf16 %v655
        %v672 = vunpack.c.l.s8.bf16 %v656
        %v673 = vunpack.c.l.s8.bf16 %v657
        %v674 = vunpack.c.l.s8.bf16 %v658
        %v675 = vunpack.c.l.s8.bf16 %v659
        %v676 = vunpack.c.l.s8.bf16 %v660
        %v677 = vunpack.c.l.s8.bf16 %v661
        %v678 = vunpack.c.h.s8.bf16 %v654
        %v679 = vunpack.c.h.s8.bf16 %v655
        %v680 = vunpack.c.h.s8.bf16 %v656
        %v681 = vunpack.c.h.s8.bf16 %v657
        %v682 = vunpack.c.h.s8.bf16 %v658
        %v683 = vunpack.c.h.s8.bf16 %v659
        %v684 = vunpack.c.h.s8.bf16 %v660
        %v685 = vunpack.c.h.s8.bf16 %v661
        %v686 = vunpack.c.l.s8.bf16 %v662
        %v687 = vunpack.c.l.s8.bf16 %v663
        %v688 = vunpack.c.l.s8.bf16 %v664
        %v689 = vunpack.c.l.s8.bf16 %v665
        %v690 = vunpack.c.l.s8.bf16 %v666
        %v691 = vunpack.c.l.s8.bf16 %v667
        %v692 = vunpack.c.l.s8.bf16 %v668
        %v693 = vunpack.c.l.s8.bf16 %v669
        %v694 = vunpack.c.h.s8.bf16 %v662
        %v695 = vunpack.c.h.s8.bf16 %v663
        %v696 = vunpack.c.h.s8.bf16 %v664
        %v697 = vunpack.c.h.s8.bf16 %v665
        %v698 = vunpack.c.h.s8.bf16 %v666
        %v699 = vunpack.c.h.s8.bf16 %v667
        %v700 = vunpack.c.h.s8.bf16 %v668
        %v701 = vunpack.c.h.s8.bf16 %v669
        %v702 = vld [vmem:[%s416] sm:$0xff]
        %v703 = vld [vmem:[%s416 + $0x8] sm:$0xff]
        %v705 = vcombine.high %v702, %v702
        %v707 = vunpack.c.l.s4 1966171168
        %v708 = vunpack.c.0.s8 %v707
        %v709 = vlaneseq
        %v710 = vshrl.u32 %v709, 7
        %v711 = vsub.s32 %v708, %v710
        %v712 = vrot.slane %v702, %v711
        %v714 = vunpack.c.l.s4 1966171168
        %v715 = vunpack.c.0.s8 %v714
        %v716 = vlaneseq
        %v717 = vshrl.u32 %v716, 7
        %v718 = vsub.s32 %v715, %v717
        %v719 = vrot.slane %v705, %v718
        %v720 = vcombine.high %v712, %v712
        %v721 = vcombine.high %v719, %v719
        %v723 = vunpack.c.l.s4 1966171168
        %v724 = vunpack.c.0.s8 %v723
        %v725 = vlaneseq
        %v726 = vshrl.u32 %v725, 7
        %v727 = vsub.s32 %v724, %v726
        %v728 = vrot.slane %v712, %v727
        %v730 = vunpack.c.l.s4 1966171168
        %v731 = vunpack.c.0.s8 %v730
        %v732 = vlaneseq
        %v733 = vshrl.u32 %v732, 7
        %v734 = vsub.s32 %v731, %v733
        %v735 = vrot.slane %v719, %v734
        %v737 = vunpack.c.l.s4 1966171168
        %v738 = vunpack.c.0.s8 %v737
        %v739 = vlaneseq
        %v740 = vshrl.u32 %v739, 7
        %v741 = vsub.s32 %v738, %v740
        %v742 = vrot.slane %v720, %v741
        %v744 = vunpack.c.l.s4 1966171168
        %v745 = vunpack.c.0.s8 %v744
        %v746 = vlaneseq
        %v747 = vshrl.u32 %v746, 7
        %v748 = vsub.s32 %v745, %v747
        %v749 = vrot.slane %v721, %v748
        %v750 = vcombine.high %v728, %v728
        %v751 = vcombine.high %v735, %v735
        %v752 = vcombine.high %v742, %v742
        %v753 = vcombine.high %v749, %v749
        %762 = vmatprep.subr.bf16.mxu0 0
        %763 = vmatpush1.bf16.msra.mxu0 %v526
        %764 = vmatprep.subr.bf16.mxu0 0
        %765 = vmatpush1.bf16.msra.mxu0 %v527
        %766 = vmatprep.subr.bf16.mxu0 0
        %767 = vmatpush1.bf16.msra.mxu0 %v528
        %768 = vmatprep.subr.bf16.mxu0 0
        %769 = vmatpush1.bf16.msra.mxu0 %v529
        %770 = vmatprep.subr.bf16.mxu0 0
        %771 = vmatpush1.bf16.msra.mxu0 %v530
        %772 = vmatprep.subr.bf16.mxu0 0
        %773 = vmatpush1.bf16.msra.mxu0 %v531
        %774 = vmatprep.subr.bf16.mxu0 0
        %775 = vmatpush1.bf16.msra.mxu0 %v532
        %776 = vmatprep.subr.bf16.mxu0 0
        %777 = vmatpush1.bf16.msra.mxu0 %v533
        %778 = vmatprep.subr.bf16.mxu0 0
        %779 = vmatpush1.bf16.msra.mxu0 %v534
        %780 = vmatprep.subr.bf16.mxu0 0
        %781 = vmatpush1.bf16.msra.mxu0 %v535
        %782 = vmatprep.subr.bf16.mxu0 0
        %783 = vmatpush1.bf16.msra.mxu0 %v536
        %784 = vmatprep.subr.bf16.mxu0 0
        %785 = vmatpush1.bf16.msra.mxu0 %v537
        %786 = vmatprep.subr.bf16.mxu0 0
        %787 = vmatpush1.bf16.msra.mxu0 %v538
        %788 = vmatprep.subr.bf16.mxu0 0
        %789 = vmatpush1.bf16.msra.mxu0 %v539
        %790 = vmatprep.subr.bf16.mxu0 0
        %791 = vmatpush1.bf16.msra.mxu0 %v540
        %792 = vmatprep.subr.bf16.mxu0 0
        %793 = vmatpush1.bf16.msra.mxu0 %v541
        %794 = vmatprep.mubr.bf16.mxu0 %v742
        %795 = vmatmul.mubr.bf16.gmra.mrb[0].mxu0 %v728
        %v796 = vpop.f32.mrb[0].mxu0
        %v797 = vadd.f32 0.0, %v796
        %v798 = vpop.f32.mrb[0].mxu0
        %v799 = vpop.f32.mrb[0].mxu0
        %v800 = vpop.f32.mrb[0].mxu0
        %801 = vdwg.mxu0
        %802 = vmatprep.subr.bf16.mxu0 0
        %803 = vmatpush1.bf16.msra.mxu0 %v542
        %804 = vmatprep.subr.bf16.mxu0 0
        %805 = vmatpush1.bf16.msra.mxu0 %v543
        %806 = vmatprep.subr.bf16.mxu0 0
        %807 = vmatpush1.bf16.msra.mxu0 %v544
        %808 = vmatprep.subr.bf16.mxu0 0
        %809 = vmatpush1.bf16.msra.mxu0 %v545
        %810 = vmatprep.subr.bf16.mxu0 0
        %811 = vmatpush1.bf16.msra.mxu0 %v546
        %812 = vmatprep.subr.bf16.mxu0 0
        %813 = vmatpush1.bf16.msra.mxu0 %v547
        %814 = vmatprep.subr.bf16.mxu0 0
        %815 = vmatpush1.bf16.msra.mxu0 %v548
        %816 = vmatprep.subr.bf16.mxu0 0
        %817 = vmatpush1.bf16.msra.mxu0 %v549
        %818 = vmatprep.subr.bf16.mxu0 0
        %819 = vmatpush1.bf16.msra.mxu0 %v550
        %820 = vmatprep.subr.bf16.mxu0 0
        %821 = vmatpush1.bf16.msra.mxu0 %v551
        %822 = vmatprep.subr.bf16.mxu0 0
        %823 = vmatpush1.bf16.msra.mxu0 %v552
        %824 = vmatprep.subr.bf16.mxu0 0
        %825 = vmatpush1.bf16.msra.mxu0 %v553
        %826 = vmatprep.subr.bf16.mxu0 0
        %827 = vmatpush1.bf16.msra.mxu0 %v554
        %828 = vmatprep.subr.bf16.mxu0 0
        %829 = vmatpush1.bf16.msra.mxu0 %v555
        %830 = vmatprep.subr.bf16.mxu0 0
        %831 = vmatpush1.bf16.msra.mxu0 %v556
        %832 = vmatprep.subr.bf16.mxu0 0
        %833 = vmatpush1.bf16.msra.mxu0 %v557
        %834 = vmatprep.mubr.bf16.mxu0 %v752
        %835 = vmatmul.mubr.bf16.gmra.mrb[0].mxu0 %v750
        %v836 = vpop.f32.mrb[0].mxu0
        %v837 = vadd.f32 %v797, %v836
        %v838 = vpop.f32.mrb[0].mxu0
        %v839 = vpop.f32.mrb[0].mxu0
        %v840 = vpop.f32.mrb[0].mxu0
        %841 = vdwg.mxu0
        %842 = vmatprep.subr.bf16.mxu0 0
        %843 = vmatpush1.bf16.msra.mxu0 %v558
        %844 = vmatprep.subr.bf16.mxu0 0
        %845 = vmatpush1.bf16.msra.mxu0 %v559
        %846 = vmatprep.subr.bf16.mxu0 0
        %847 = vmatpush1.bf16.msra.mxu0 %v560
        %848 = vmatprep.subr.bf16.mxu0 0
        %849 = vmatpush1.bf16.msra.mxu0 %v561
        %850 = vmatprep.subr.bf16.mxu0 0
        %851 = vmatpush1.bf16.msra.mxu0 %v562
        %852 = vmatprep.subr.bf16.mxu0 0
        %853 = vmatpush1.bf16.msra.mxu0 %v563
        %854 = vmatprep.subr.bf16.mxu0 0
        %855 = vmatpush1.bf16.msra.mxu0 %v564
        %856 = vmatprep.subr.bf16.mxu0 0
        %857 = vmatpush1.bf16.msra.mxu0 %v565
        %858 = vmatprep.subr.bf16.mxu0 0
        %859 = vmatpush1.bf16.msra.mxu0 %v566
        %860 = vmatprep.subr.bf16.mxu0 0
        %861 = vmatpush1.bf16.msra.mxu0 %v567
        %862 = vmatprep.subr.bf16.mxu0 0
        %863 = vmatpush1.bf16.msra.mxu0 %v568
        %864 = vmatprep.subr.bf16.mxu0 0
        %865 = vmatpush1.bf16.msra.mxu0 %v569
        %866 = vmatprep.subr.bf16.mxu0 0
        %867 = vmatpush1.bf16.msra.mxu0 %v570
        %868 = vmatprep.subr.bf16.mxu0 0
        %869 = vmatpush1.bf16.msra.mxu0 %v571
        %870 = vmatprep.subr.bf16.mxu0 0
        %871 = vmatpush1.bf16.msra.mxu0 %v572
        %872 = vmatprep.subr.bf16.mxu0 0
        %873 = vmatpush1.bf16.msra.mxu0 %v573
        %874 = vmatprep.mubr.bf16.mxu0 %v749
        %875 = vmatmul.mubr.bf16.gmra.mrb[0].mxu0 %v735
        %v876 = vpop.f32.mrb[0].mxu0
        %v877 = vadd.f32 %v837, %v876
        %v878 = vpop.f32.mrb[0].mxu0
        %v879 = vpop.f32.mrb[0].mxu0
        %v880 = vpop.f32.mrb[0].mxu0
        %881 = vdwg.mxu0
        %882 = vmatprep.subr.bf16.mxu0 0
        %883 = vmatpush1.bf16.msra.mxu0 %v574
        %884 = vmatprep.subr.bf16.mxu0 0
        %885 = vmatpush1.bf16.msra.mxu0 %v575
        %886 = vmatprep.subr.bf16.mxu0 0
        %887 = vmatpush1.bf16.msra.mxu0 %v576
        %888 = vmatprep.subr.bf16.mxu0 0
        %889 = vmatpush1.bf16.msra.mxu0 %v577
        %890 = vmatprep.subr.bf16.mxu0 0
        %891 = vmatpush1.bf16.msra.mxu0 %v578
        %892 = vmatprep.subr.bf16.mxu0 0
        %893 = vmatpush1.bf16.msra.mxu0 %v579
        %894 = vmatprep.subr.bf16.mxu0 0
        %895 = vmatpush1.bf16.msra.mxu0 %v580
        %896 = vmatprep.subr.bf16.mxu0 0
        %897 = vmatpush1.bf16.msra.mxu0 %v581
        %898 = vmatprep.subr.bf16.mxu0 0
        %899 = vmatpush1.bf16.msra.mxu0 %v582
        %900 = vmatprep.subr.bf16.mxu0 0
        %901 = vmatpush1.bf16.msra.mxu0 %v583
        %902 = vmatprep.subr.bf16.mxu0 0
        %903 = vmatpush1.bf16.msra.mxu0 %v584
        %904 = vmatprep.subr.bf16.mxu0 0
        %905 = vmatpush1.bf16.msra.mxu0 %v585
        %906 = vmatprep.subr.bf16.mxu0 0
        %907 = vmatpush1.bf16.msra.mxu0 %v586
        %908 = vmatprep.subr.bf16.mxu0 0
        %909 = vmatpush1.bf16.msra.mxu0 %v587
        %910 = vmatprep.subr.bf16.mxu0 0
        %911 = vmatpush1.bf16.msra.mxu0 %v588
        %912 = vmatprep.subr.bf16.mxu0 0
        %913 = vmatpush1.bf16.msra.mxu0 %v589
        %914 = vmatprep.mubr.bf16.mxu0 %v753
        %915 = vmatmul.mubr.bf16.gmra.mrb[0].mxu0 %v751
        %v916 = vpop.f32.mrb[0].mxu0
        %v917 = vadd.f32 %v877, %v916
        %v918 = vpop.f32.mrb[0].mxu0
        %v919 = vpop.f32.mrb[0].mxu0
        %v920 = vpop.f32.mrb[0].mxu0
        %921 = vdwg.mxu0
        %v923 = vcombine.high %v703, %v703
        %v925 = vunpack.c.l.s4 1966171168
        %v926 = vunpack.c.0.s8 %v925
        %v927 = vlaneseq
        %v928 = vshrl.u32 %v927, 7
        %v929 = vsub.s32 %v926, %v928
        %v930 = vrot.slane %v703, %v929
        %v932 = vunpack.c.l.s4 1966171168
        %v933 = vunpack.c.0.s8 %v932
        %v934 = vlaneseq
        %v935 = vshrl.u32 %v934, 7
        %v936 = vsub.s32 %v933, %v935
        %v937 = vrot.slane %v923, %v936
        %v938 = vcombine.high %v930, %v930
        %v939 = vcombine.high %v937, %v937
        %v941 = vunpack.c.l.s4 1966171168
        %v942 = vunpack.c.0.s8 %v941
        %v943 = vlaneseq
        %v944 = vshrl.u32 %v943, 7
        %v945 = vsub.s32 %v942, %v944
        %v946 = vrot.slane %v930, %v945
        %v948 = vunpack.c.l.s4 1966171168
        %v949 = vunpack.c.0.s8 %v948
        %v950 = vlaneseq
        %v951 = vshrl.u32 %v950, 7
        %v952 = vsub.s32 %v949, %v951
        %v953 = vrot.slane %v937, %v952
        %v955 = vunpack.c.l.s4 1966171168
        %v956 = vunpack.c.0.s8 %v955
        %v957 = vlaneseq
        %v958 = vshrl.u32 %v957, 7
        %v959 = vsub.s32 %v956, %v958
        %v960 = vrot.slane %v938, %v959
        %v962 = vunpack.c.l.s4 1966171168
        %v963 = vunpack.c.0.s8 %v962
        %v964 = vlaneseq
        %v965 = vshrl.u32 %v964, 7
        %v966 = vsub.s32 %v963, %v965
        %v967 = vrot.slane %v939, %v966
        %v968 = vcombine.high %v946, %v946
        %v969 = vcombine.high %v953, %v953
        %v970 = vcombine.high %v960, %v960
        %v971 = vcombine.high %v967, %v967
        %980 = vmatprep.subr.bf16.mxu0 0
        %981 = vmatpush1.bf16.msra.mxu0 %v590
        %982 = vmatprep.subr.bf16.mxu0 0
        %983 = vmatpush1.bf16.msra.mxu0 %v591
        %984 = vmatprep.subr.bf16.mxu0 0
        %985 = vmatpush1.bf16.msra.mxu0 %v592
        %986 = vmatprep.subr.bf16.mxu0 0
        %987 = vmatpush1.bf16.msra.mxu0 %v593
        %988 = vmatprep.subr.bf16.mxu0 0
        %989 = vmatpush1.bf16.msra.mxu0 %v594
        %990 = vmatprep.subr.bf16.mxu0 0
        %991 = vmatpush1.bf16.msra.mxu0 %v595
        %992 = vmatprep.subr.bf16.mxu0 0
        %993 = vmatpush1.bf16.msra.mxu0 %v596
        %994 = vmatprep.subr.bf16.mxu0 0
        %995 = vmatpush1.bf16.msra.mxu0 %v597
        %996 = vmatprep.subr.bf16.mxu0 0
        %997 = vmatpush1.bf16.msra.mxu0 %v598
        %998 = vmatprep.subr.bf16.mxu0 0
        %999 = vmatpush1.bf16.msra.mxu0 %v599
        %1000 = vmatprep.subr.bf16.mxu0 0
        %1001 = vmatpush1.bf16.msra.mxu0 %v600
        %1002 = vmatprep.subr.bf16.mxu0 0
        %1003 = vmatpush1.bf16.msra.mxu0 %v601
        %1004 = vmatprep.subr.bf16.mxu0 0
        %1005 = vmatpush1.bf16.msra.mxu0 %v602
        %1006 = vmatprep.subr.bf16.mxu0 0
        %1007 = vmatpush1.bf16.msra.mxu0 %v603
        %1008 = vmatprep.subr.bf16.mxu0 0
        %1009 = vmatpush1.bf16.msra.mxu0 %v604
        %1010 = vmatprep.subr.bf16.mxu0 0
        %1011 = vmatpush1.bf16.msra.mxu0 %v605
        %1012 = vmatprep.mubr.bf16.mxu0 %v960
        %1013 = vmatmul.mubr.bf16.gmra.mrb[0].mxu0 %v946
        %v1014 = vpop.f32.mrb[0].mxu0
        %v1015 = vadd.f32 0.0, %v1014
        %v1016 = vpop.f32.mrb[0].mxu0
        %v1017 = vpop.f32.mrb[0].mxu0
        %v1018 = vpop.f32.mrb[0].mxu0
        %1019 = vdwg.mxu0
        %1020 = vmatprep.subr.bf16.mxu0 0
        %1021 = vmatpush1.bf16.msra.mxu0 %v606
        %1022 = vmatprep.subr.bf16.mxu0 0
        %1023 = vmatpush1.bf16.msra.mxu0 %v607
        %1024 = vmatprep.subr.bf16.mxu0 0
        %1025 = vmatpush1.bf16.msra.mxu0 %v608
        %1026 = vmatprep.subr.bf16.mxu0 0
        %1027 = vmatpush1.bf16.msra.mxu0 %v609
        %1028 = vmatprep.subr.bf16.mxu0 0
        %1029 = vmatpush1.bf16.msra.mxu0 %v610
        %1030 = vmatprep.subr.bf16.mxu0 0
        %1031 = vmatpush1.bf16.msra.mxu0 %v611
        %1032 = vmatprep.subr.bf16.mxu0 0
        %1033 = vmatpush1.bf16.msra.mxu0 %v612
        %1034 = vmatprep.subr.bf16.mxu0 0
        %1035 = vmatpush1.bf16.msra.mxu0 %v613
        %1036 = vmatprep.subr.bf16.mxu0 0
        %1037 = vmatpush1.bf16.msra.mxu0 %v614
        %1038 = vmatprep.subr.bf16.mxu0 0
        %1039 = vmatpush1.bf16.msra.mxu0 %v615
        %1040 = vmatprep.subr.bf16.mxu0 0
        %1041 = vmatpush1.bf16.msra.mxu0 %v616
        %1042 = vmatprep.subr.bf16.mxu0 0
        %1043 = vmatpush1.bf16.msra.mxu0 %v617
        %1044 = vmatprep.subr.bf16.mxu0 0
        %1045 = vmatpush1.bf16.msra.mxu0 %v618
        %1046 = vmatprep.subr.bf16.mxu0 0
        %1047 = vmatpush1.bf16.msra.mxu0 %v619
        %1048 = vmatprep.subr.bf16.mxu0 0
        %1049 = vmatpush1.bf16.msra.mxu0 %v620
        %1050 = vmatprep.subr.bf16.mxu0 0
        %1051 = vmatpush1.bf16.msra.mxu0 %v621
        %1052 = vmatprep.mubr.bf16.mxu0 %v970
        %1053 = vmatmul.mubr.bf16.gmra.mrb[0].mxu0 %v968
        %v1054 = vpop.f32.mrb[0].mxu0
        %v1055 = vadd.f32 %v1015, %v1054
        %v1056 = vpop.f32.mrb[0].mxu0
        %v1057 = vpop.f32.mrb[0].mxu0
        %v1058 = vpop.f32.mrb[0].mxu0
        %1059 = vdwg.mxu0
        %1060 = vmatprep.subr.bf16.mxu0 0
        %1061 = vmatpush1.bf16.msra.mxu0 %v622
        %1062 = vmatprep.subr.bf16.mxu0 0
        %1063 = vmatpush1.bf16.msra.mxu0 %v623
        %1064 = vmatprep.subr.bf16.mxu0 0
        %1065 = vmatpush1.bf16.msra.mxu0 %v624
        %1066 = vmatprep.subr.bf16.mxu0 0
        %1067 = vmatpush1.bf16.msra.mxu0 %v625
        %1068 = vmatprep.subr.bf16.mxu0 0
        %1069 = vmatpush1.bf16.msra.mxu0 %v626
        %1070 = vmatprep.subr.bf16.mxu0 0
        %1071 = vmatpush1.bf16.msra.mxu0 %v627
        %1072 = vmatprep.subr.bf16.mxu0 0
        %1073 = vmatpush1.bf16.msra.mxu0 %v628
        %1074 = vmatprep.subr.bf16.mxu0 0
        %1075 = vmatpush1.bf16.msra.mxu0 %v629
        %1076 = vmatprep.subr.bf16.mxu0 0
        %1077 = vmatpush1.bf16.msra.mxu0 %v630
        %1078 = vmatprep.subr.bf16.mxu0 0
        %1079 = vmatpush1.bf16.msra.mxu0 %v631
        %1080 = vmatprep.subr.bf16.mxu0 0
        %1081 = vmatpush1.bf16.msra.mxu0 %v632
        %1082 = vmatprep.subr.bf16.mxu0 0
        %1083 = vmatpush1.bf16.msra.mxu0 %v633
        %1084 = vmatprep.subr.bf16.mxu0 0
        %1085 = vmatpush1.bf16.msra.mxu0 %v634
        %1086 = vmatprep.subr.bf16.mxu0 0
        %1087 = vmatpush1.bf16.msra.mxu0 %v635
        %1088 = vmatprep.subr.bf16.mxu0 0
        %1089 = vmatpush1.bf16.msra.mxu0 %v636
        %1090 = vmatprep.subr.bf16.mxu0 0
        %1091 = vmatpush1.bf16.msra.mxu0 %v637
        %1092 = vmatprep.mubr.bf16.mxu0 %v967
        %1093 = vmatmul.mubr.bf16.gmra.mrb[0].mxu0 %v953
        %v1094 = vpop.f32.mrb[0].mxu0
        %v1095 = vadd.f32 %v1055, %v1094
        %v1096 = vpop.f32.mrb[0].mxu0
        %v1097 = vpop.f32.mrb[0].mxu0
        %v1098 = vpop.f32.mrb[0].mxu0
        %1099 = vdwg.mxu0
        %1100 = vmatprep.subr.bf16.mxu0 0
        %1101 = vmatpush1.bf16.msra.mxu0 %v638
        %1102 = vmatprep.subr.bf16.mxu0 0
        %1103 = vmatpush1.bf16.msra.mxu0 %v639
        %1104 = vmatprep.subr.bf16.mxu0 0
        %1105 = vmatpush1.bf16.msra.mxu0 %v640
        %1106 = vmatprep.subr.bf16.mxu0 0
        %1107 = vmatpush1.bf16.msra.mxu0 %v641
        %1108 = vmatprep.subr.bf16.mxu0 0
        %1109 = vmatpush1.bf16.msra.mxu0 %v642
        %1110 = vmatprep.subr.bf16.mxu0 0
        %1111 = vmatpush1.bf16.msra.mxu0 %v643
        %1112 = vmatprep.subr.bf16.mxu0 0
        %1113 = vmatpush1.bf16.msra.mxu0 %v644
        %1114 = vmatprep.subr.bf16.mxu0 0
        %1115 = vmatpush1.bf16.msra.mxu0 %v645
        %1116 = vmatprep.subr.bf16.mxu0 0
        %1117 = vmatpush1.bf16.msra.mxu0 %v646
        %1118 = vmatprep.subr.bf16.mxu0 0
        %1119 = vmatpush1.bf16.msra.mxu0 %v647
        %1120 = vmatprep.subr.bf16.mxu0 0
        %1121 = vmatpush1.bf16.msra.mxu0 %v648
        %1122 = vmatprep.subr.bf16.mxu0 0
        %1123 = vmatpush1.bf16.msra.mxu0 %v649
        %1124 = vmatprep.subr.bf16.mxu0 0
        %1125 = vmatpush1.bf16.msra.mxu0 %v650
        %1126 = vmatprep.subr.bf16.mxu0 0
        %1127 = vmatpush1.bf16.msra.mxu0 %v651
        %1128 = vmatprep.subr.bf16.mxu0 0
        %1129 = vmatpush1.bf16.msra.mxu0 %v652
        %1130 = vmatprep.subr.bf16.mxu0 0
        %1131 = vmatpush1.bf16.msra.mxu0 %v653
        %1132 = vmatprep.mubr.bf16.mxu0 %v971
        %1133 = vmatmul.mubr.bf16.gmra.mrb[0].mxu0 %v969
        %v1134 = vpop.f32.mrb[0].mxu0
        %v1135 = vadd.f32 %v1095, %v1134
        %v1136 = vpop.f32.mrb[0].mxu0
        %v1137 = vpop.f32.mrb[0].mxu0
        %v1138 = vpop.f32.mrb[0].mxu0
        %1139 = vdwg.mxu0
        %v1140 = vld [vmem:[%s428] sm:$0x1]
        %v1141 = vld [vmem:[%s428 + $0x1] sm:$0x1]
        %v1144 = vlaneseq
        %v1145 = vshrl.u32 %v1144, 7
        %v1146 = vsub.s32 0, %v1145
        %v1147 = vrot.slane %v1140, %v1146
        %v1148 = vlaneseq
        %v1149 = vshrl.u32 %v1148, 7
        %v1150 = vsub.s32 0, %v1149
        %v1151 = vrot.slane %v1141, %v1150
        %v1154 = vmul.f32 %v917, %v1147
        %v1155 = vmul.f32 %v1135, %v1151
        %v1156 = vld [vmem:[%s433] sm:$0x1]
        %v1157 = vld [vmem:[%s433 + $0x1] sm:$0x1]
        %v1160 = vlaneseq
        %v1161 = vshrl.u32 %v1160, 7
        %v1162 = vsub.s32 0, %v1161
        %v1163 = vrot.slane %v1156, %v1162
        %v1164 = vlaneseq
        %v1165 = vshrl.u32 %v1164, 7
        %v1166 = vsub.s32 0, %v1165
        %v1167 = vrot.slane %v1157, %v1166
        %v1170 = vadd.f32 %v1154, %v1163
        %v1171 = vadd.f32 %v1155, %v1167
        %v1172 = vmul.f32 %v1170, 0.5
        %v1173 = vmul.f32 %v1171, 0.5
        %v1174 = vmul.f32 %v1172, 1.442695
        %v1175 = vpow.pop %v1174
        %v1176 = vmul.f32 %v1173, 1.442695
        %v1177 = vpow.pop %v1176
        %v1178 = vld [vmem:[%s458] sm:$0x3]
        %v1179 = vld [vmem:[%s458 + $0x2] sm:$0x3]
        %1182 = vrot.lane.b32.xlu0 %v1178, 32
        %v1183 = vpop.permute.xlu0 %1182
        %1184 = vrot.lane.b32.xlu0 %v1179, 32
        %v1185 = vpop.permute.xlu0 %1184
        %v1188 = vmul.f32 %v1175, %v1183
        %v1189 = vmul.f32 %v1177, %v1185
        %1192 = vrot.lane.b32.xlu0 %v1188, 96
        %v1193 = vpop.permute.xlu0 %1192
        %1194 = vrot.lane.b32.xlu0 %v1189, 96
        %v1195 = vpop.permute.xlu0 %1194
        %v1198 = vadd.f32 %v1170, %v1193
        %v1199 = vadd.f32 %v1171, %v1195
        %v1200 = vpack.c.bf16 %v1198, %v1198
        %v1201 = vpack.c.bf16 %v1199, %v1199
        %vm1202 = vcmask 261120
        %v1204 = vsel %vm1202, %v1200, 0
        %1206 = vmatprep.subr.bf16.mxu0 %v671
        %1207 = vmatpush1.bf16.msra.mxu0 %v670
        %1208 = vmatprep.subr.bf16.mxu0 %v679
        %1209 = vmatpush1.bf16.msra.mxu0 %v678
        %1210 = vmatprep.subr.bf16.mxu0 0
        %1211 = vmatpush1.bf16.msra.mxu0 0
        %1212 = vmatprep.subr.bf16.mxu0 0
        %1213 = vmatpush1.bf16.msra.mxu0 0
        %1214 = vmatprep.subr.bf16.mxu0 0
        %1215 = vmatpush1.bf16.msra.mxu0 0
        %1216 = vmatprep.subr.bf16.mxu0 0
        %1217 = vmatpush1.bf16.msra.mxu0 0
        %1218 = vmatprep.subr.bf16.mxu0 0
        %1219 = vmatpush1.bf16.msra.mxu0 0
        %1220 = vmatprep.subr.bf16.mxu0 0
        %1221 = vmatpush1.bf16.msra.mxu0 0
        %1222 = vmatprep.subr.bf16.mxu0 0
        %1223 = vmatpush1.bf16.msra.mxu0 0
        %1224 = vmatprep.subr.bf16.mxu0 0
        %1225 = vmatpush1.bf16.msra.mxu0 0
        %1226 = vmatprep.subr.bf16.mxu0 0
        %1227 = vmatpush1.bf16.msra.mxu0 0
        %1228 = vmatprep.subr.bf16.mxu0 0
        %1229 = vmatpush1.bf16.msra.mxu0 0
        %1230 = vmatprep.subr.bf16.mxu0 0
        %1231 = vmatpush1.bf16.msra.mxu0 0
        %1232 = vmatprep.subr.bf16.mxu0 0
        %1233 = vmatpush1.bf16.msra.mxu0 0
        %1234 = vmatprep.subr.bf16.mxu0 0
        %1235 = vmatpush1.bf16.msra.mxu0 0
        %1236 = vmatprep.subr.bf16.mxu0 0
        %1237 = vmatpush1.bf16.msra.mxu0 0
        %1238 = vmatprep.mubr.bf16.mxu0 0
        %1239 = vmatmul.mubr.bf16.gmra.mrb[0].mxu0 %v1204
        %v1240 = vpop.f32.mrb[0].mxu0
        %v1241 = vadd.f32 0.0, %v1240
        %v1242 = vpop.f32.mrb[0].mxu0
        %v1243 = vadd.f32 0.0, %v1242
        %v1244 = vpop.f32.mrb[0].mxu0
        %v1245 = vpop.f32.mrb[0].mxu0
        %1246 = vdwg.mxu0
        %1247 = vmatprep.subr.bf16.mxu0 %v673
        %1248 = vmatpush1.bf16.msra.mxu0 %v672
        %1249 = vmatprep.subr.bf16.mxu0 %v681
        %1250 = vmatpush1.bf16.msra.mxu0 %v680
        %1251 = vmatprep.subr.bf16.mxu0 0
        %1252 = vmatpush1.bf16.msra.mxu0 0
        %1253 = vmatprep.subr.bf16.mxu0 0
        %1254 = vmatpush1.bf16.msra.mxu0 0
        %1255 = vmatprep.subr.bf16.mxu0 0
        %1256 = vmatpush1.bf16.msra.mxu0 0
        %1257 = vmatprep.subr.bf16.mxu0 0
        %1258 = vmatpush1.bf16.msra.mxu0 0
        %1259 = vmatprep.subr.bf16.mxu0 0
        %1260 = vmatpush1.bf16.msra.mxu0 0
        %1261 = vmatprep.subr.bf16.mxu0 0
        %1262 = vmatpush1.bf16.msra.mxu0 0
        %1263 = vmatprep.subr.bf16.mxu0 0
        %1264 = vmatpush1.bf16.msra.mxu0 0
        %1265 = vmatprep.subr.bf16.mxu0 0
        %1266 = vmatpush1.bf16.msra.mxu0 0
        %1267 = vmatprep.subr.bf16.mxu0 0
        %1268 = vmatpush1.bf16.msra.mxu0 0
        %1269 = vmatprep.subr.bf16.mxu0 0
        %1270 = vmatpush1.bf16.msra.mxu0 0
        %1271 = vmatprep.subr.bf16.mxu0 0
        %1272 = vmatpush1.bf16.msra.mxu0 0
        %1273 = vmatprep.subr.bf16.mxu0 0
        %1274 = vmatpush1.bf16.msra.mxu0 0
        %1275 = vmatprep.subr.bf16.mxu0 0
        %1276 = vmatpush1.bf16.msra.mxu0 0
        %1277 = vmatprep.subr.bf16.mxu0 0
        %1278 = vmatpush1.bf16.msra.mxu0 0
        %1279 = vmatprep.mubr.bf16.mxu0 0
        %1280 = vmatmul.mubr.bf16.gmra.mrb[0].mxu0 %v1204
        %v1281 = vpop.f32.mrb[0].mxu0
        %v1282 = vadd.f32 0.0, %v1281
        %v1283 = vpop.f32.mrb[0].mxu0
        %v1284 = vadd.f32 0.0, %v1283
        %v1285 = vpop.f32.mrb[0].mxu0
        %v1286 = vpop.f32.mrb[0].mxu0
        %1287 = vdwg.mxu0
        %1288 = vmatprep.subr.bf16.mxu0 %v675
        %1289 = vmatpush1.bf16.msra.mxu0 %v674
        %1290 = vmatprep.subr.bf16.mxu0 %v683
        %1291 = vmatpush1.bf16.msra.mxu0 %v682
        %1292 = vmatprep.subr.bf16.mxu0 0
        %1293 = vmatpush1.bf16.msra.mxu0 0
        %1294 = vmatprep.subr.bf16.mxu0 0
        %1295 = vmatpush1.bf16.msra.mxu0 0
        %1296 = vmatprep.subr.bf16.mxu0 0
        %1297 = vmatpush1.bf16.msra.mxu0 0
        %1298 = vmatprep.subr.bf16.mxu0 0
        %1299 = vmatpush1.bf16.msra.mxu0 0
        %1300 = vmatprep.subr.bf16.mxu0 0
        %1301 = vmatpush1.bf16.msra.mxu0 0
        %1302 = vmatprep.subr.bf16.mxu0 0
        %1303 = vmatpush1.bf16.msra.mxu0 0
        %1304 = vmatprep.subr.bf16.mxu0 0
        %1305 = vmatpush1.bf16.msra.mxu0 0
        %1306 = vmatprep.subr.bf16.mxu0 0
        %1307 = vmatpush1.bf16.msra.mxu0 0
        %1308 = vmatprep.subr.bf16.mxu0 0
        %1309 = vmatpush1.bf16.msra.mxu0 0
        %1310 = vmatprep.subr.bf16.mxu0 0
        %1311 = vmatpush1.bf16.msra.mxu0 0
        %1312 = vmatprep.subr.bf16.mxu0 0
        %1313 = vmatpush1.bf16.msra.mxu0 0
        %1314 = vmatprep.subr.bf16.mxu0 0
        %1315 = vmatpush1.bf16.msra.mxu0 0
        %1316 = vmatprep.subr.bf16.mxu0 0
        %1317 = vmatpush1.bf16.msra.mxu0 0
        %1318 = vmatprep.subr.bf16.mxu0 0
        %1319 = vmatpush1.bf16.msra.mxu0 0
        %1320 = vmatprep.mubr.bf16.mxu0 0
        %1321 = vmatmul.mubr.bf16.gmra.mrb[0].mxu0 %v1204
        %v1322 = vpop.f32.mrb[0].mxu0
        %v1323 = vadd.f32 0.0, %v1322
        %v1324 = vpop.f32.mrb[0].mxu0
        %v1325 = vadd.f32 0.0, %v1324
        %v1326 = vpop.f32.mrb[0].mxu0
        %v1327 = vpop.f32.mrb[0].mxu0
        %1328 = vdwg.mxu0
        %1329 = vmatprep.subr.bf16.mxu0 %v677
        %1330 = vmatpush1.bf16.msra.mxu0 %v676
        %1331 = vmatprep.subr.bf16.mxu0 %v685
        %1332 = vmatpush1.bf16.msra.mxu0 %v684
        %1333 = vmatprep.subr.bf16.mxu0 0
        %1334 = vmatpush1.bf16.msra.mxu0 0
        %1335 = vmatprep.subr.bf16.mxu0 0
        %1336 = vmatpush1.bf16.msra.mxu0 0
        %1337 = vmatprep.subr.bf16.mxu0 0
        %1338 = vmatpush1.bf16.msra.mxu0 0
        %1339 = vmatprep.subr.bf16.mxu0 0
        %1340 = vmatpush1.bf16.msra.mxu0 0
        %1341 = vmatprep.subr.bf16.mxu0 0
        %1342 = vmatpush1.bf16.msra.mxu0 0
        %1343 = vmatprep.subr.bf16.mxu0 0
        %1344 = vmatpush1.bf16.msra.mxu0 0
        %1345 = vmatprep.subr.bf16.mxu0 0
        %1346 = vmatpush1.bf16.msra.mxu0 0
        %1347 = vmatprep.subr.bf16.mxu0 0
        %1348 = vmatpush1.bf16.msra.mxu0 0
        %1349 = vmatprep.subr.bf16.mxu0 0
        %1350 = vmatpush1.bf16.msra.mxu0 0
        %1351 = vmatprep.subr.bf16.mxu0 0
        %1352 = vmatpush1.bf16.msra.mxu0 0
        %1353 = vmatprep.subr.bf16.mxu0 0
        %1354 = vmatpush1.bf16.msra.mxu0 0
        %1355 = vmatprep.subr.bf16.mxu0 0
        %1356 = vmatpush1.bf16.msra.mxu0 0
        %1357 = vmatprep.subr.bf16.mxu0 0
        %1358 = vmatpush1.bf16.msra.mxu0 0
        %1359 = vmatprep.subr.bf16.mxu0 0
        %1360 = vmatpush1.bf16.msra.mxu0 0
        %1361 = vmatprep.mubr.bf16.mxu0 0
        %1362 = vmatmul.mubr.bf16.gmra.mrb[0].mxu0 %v1204
        %v1363 = vpop.f32.mrb[0].mxu0
        %v1364 = vadd.f32 0.0, %v1363
        %v1365 = vpop.f32.mrb[0].mxu0
        %v1366 = vadd.f32 0.0, %v1365
        %v1367 = vpop.f32.mrb[0].mxu0
        %v1368 = vpop.f32.mrb[0].mxu0
        %1369 = vdwg.mxu0
        %v1371 = vsel %vm1202, %v1201, 0
        %1373 = vmatprep.subr.bf16.mxu0 %v687
        %1374 = vmatpush1.bf16.msra.mxu0 %v686
        %1375 = vmatprep.subr.bf16.mxu0 %v695
        %1376 = vmatpush1.bf16.msra.mxu0 %v694
        %1377 = vmatprep.subr.bf16.mxu0 0
        %1378 = vmatpush1.bf16.msra.mxu0 0
        %1379 = vmatprep.subr.bf16.mxu0 0
        %1380 = vmatpush1.bf16.msra.mxu0 0
        %1381 = vmatprep.subr.bf16.mxu0 0
        %1382 = vmatpush1.bf16.msra.mxu0 0
        %1383 = vmatprep.subr.bf16.mxu0 0
        %1384 = vmatpush1.bf16.msra.mxu0 0
        %1385 = vmatprep.subr.bf16.mxu0 0
        %1386 = vmatpush1.bf16.msra.mxu0 0
        %1387 = vmatprep.subr.bf16.mxu0 0
        %1388 = vmatpush1.bf16.msra.mxu0 0
        %1389 = vmatprep.subr.bf16.mxu0 0
        %1390 = vmatpush1.bf16.msra.mxu0 0
        %1391 = vmatprep.subr.bf16.mxu0 0
        %1392 = vmatpush1.bf16.msra.mxu0 0
        %1393 = vmatprep.subr.bf16.mxu0 0
        %1394 = vmatpush1.bf16.msra.mxu0 0
        %1395 = vmatprep.subr.bf16.mxu0 0
        %1396 = vmatpush1.bf16.msra.mxu0 0
        %1397 = vmatprep.subr.bf16.mxu0 0
        %1398 = vmatpush1.bf16.msra.mxu0 0
        %1399 = vmatprep.subr.bf16.mxu0 0
        %1400 = vmatpush1.bf16.msra.mxu0 0
        %1401 = vmatprep.subr.bf16.mxu0 0
        %1402 = vmatpush1.bf16.msra.mxu0 0
        %1403 = vmatprep.subr.bf16.mxu0 0
        %1404 = vmatpush1.bf16.msra.mxu0 0
        %1405 = vmatprep.mubr.bf16.mxu0 0
        %1406 = vmatmul.mubr.bf16.gmra.mrb[0].mxu0 %v1371
        %v1407 = vpop.f32.mrb[0].mxu0
        %v1408 = vadd.f32 0.0, %v1407
        %v1409 = vpop.f32.mrb[0].mxu0
        %v1410 = vadd.f32 0.0, %v1409
        %v1411 = vpop.f32.mrb[0].mxu0
        %v1412 = vpop.f32.mrb[0].mxu0
        %1413 = vdwg.mxu0
        %1414 = vmatprep.subr.bf16.mxu0 %v689
        %1415 = vmatpush1.bf16.msra.mxu0 %v688
        %1416 = vmatprep.subr.bf16.mxu0 %v697
        %1417 = vmatpush1.bf16.msra.mxu0 %v696
        %1418 = vmatprep.subr.bf16.mxu0 0
        %1419 = vmatpush1.bf16.msra.mxu0 0
        %1420 = vmatprep.subr.bf16.mxu0 0
        %1421 = vmatpush1.bf16.msra.mxu0 0
        %1422 = vmatprep.subr.bf16.mxu0 0
        %1423 = vmatpush1.bf16.msra.mxu0 0
        %1424 = vmatprep.subr.bf16.mxu0 0
        %1425 = vmatpush1.bf16.msra.mxu0 0
        %1426 = vmatprep.subr.bf16.mxu0 0
        %1427 = vmatpush1.bf16.msra.mxu0 0
        %1428 = vmatprep.subr.bf16.mxu0 0
        %1429 = vmatpush1.bf16.msra.mxu0 0
        %1430 = vmatprep.subr.bf16.mxu0 0
        %1431 = vmatpush1.bf16.msra.mxu0 0
        %1432 = vmatprep.subr.bf16.mxu0 0
        %1433 = vmatpush1.bf16.msra.mxu0 0
        %1434 = vmatprep.subr.bf16.mxu0 0
        %1435 = vmatpush1.bf16.msra.mxu0 0
        %1436 = vmatprep.subr.bf16.mxu0 0
        %1437 = vmatpush1.bf16.msra.mxu0 0
        %1438 = vmatprep.subr.bf16.mxu0 0
        %1439 = vmatpush1.bf16.msra.mxu0 0
        %1440 = vmatprep.subr.bf16.mxu0 0
        %1441 = vmatpush1.bf16.msra.mxu0 0
        %1442 = vmatprep.subr.bf16.mxu0 0
        %1443 = vmatpush1.bf16.msra.mxu0 0
        %1444 = vmatprep.subr.bf16.mxu0 0
        %1445 = vmatpush1.bf16.msra.mxu0 0
        %1446 = vmatprep.mubr.bf16.mxu0 0
        %1447 = vmatmul.mubr.bf16.gmra.mrb[0].mxu0 %v1371
        %v1448 = vpop.f32.mrb[0].mxu0
        %v1449 = vadd.f32 0.0, %v1448
        %v1450 = vpop.f32.mrb[0].mxu0
        %v1451 = vadd.f32 0.0, %v1450
        %v1452 = vpop.f32.mrb[0].mxu0
        %v1453 = vpop.f32.mrb[0].mxu0
        %1454 = vdwg.mxu0
        %1455 = vmatprep.subr.bf16.mxu0 %v691
        %1456 = vmatpush1.bf16.msra.mxu0 %v690
        %1457 = vmatprep.subr.bf16.mxu0 %v699
        %1458 = vmatpush1.bf16.msra.mxu0 %v698
        %1459 = vmatprep.subr.bf16.mxu0 0
        %1460 = vmatpush1.bf16.msra.mxu0 0
        %1461 = vmatprep.subr.bf16.mxu0 0
        %1462 = vmatpush1.bf16.msra.mxu0 0
        %1463 = vmatprep.subr.bf16.mxu0 0
        %1464 = vmatpush1.bf16.msra.mxu0 0
        %1465 = vmatprep.subr.bf16.mxu0 0
        %1466 = vmatpush1.bf16.msra.mxu0 0
        %1467 = vmatprep.subr.bf16.mxu0 0
        %1468 = vmatpush1.bf16.msra.mxu0 0
        %1469 = vmatprep.subr.bf16.mxu0 0
        %1470 = vmatpush1.bf16.msra.mxu0 0
        %1471 = vmatprep.subr.bf16.mxu0 0
        %1472 = vmatpush1.bf16.msra.mxu0 0
        %1473 = vmatprep.subr.bf16.mxu0 0
        %1474 = vmatpush1.bf16.msra.mxu0 0
        %1475 = vmatprep.subr.bf16.mxu0 0
        %1476 = vmatpush1.bf16.msra.mxu0 0
        %1477 = vmatprep.subr.bf16.mxu0 0
        %1478 = vmatpush1.bf16.msra.mxu0 0
        %1479 = vmatprep.subr.bf16.mxu0 0
        %1480 = vmatpush1.bf16.msra.mxu0 0
        %1481 = vmatprep.subr.bf16.mxu0 0
        %1482 = vmatpush1.bf16.msra.mxu0 0
        %1483 = vmatprep.subr.bf16.mxu0 0
        %1484 = vmatpush1.bf16.msra.mxu0 0
        %1485 = vmatprep.subr.bf16.mxu0 0
        %1486 = vmatpush1.bf16.msra.mxu0 0
        %1487 = vmatprep.mubr.bf16.mxu0 0
        %1488 = vmatmul.mubr.bf16.gmra.mrb[0].mxu0 %v1371
        %v1489 = vpop.f32.mrb[0].mxu0
        %v1490 = vadd.f32 0.0, %v1489
        %v1491 = vpop.f32.mrb[0].mxu0
        %v1492 = vadd.f32 0.0, %v1491
        %v1493 = vpop.f32.mrb[0].mxu0
        %v1494 = vpop.f32.mrb[0].mxu0
        %1495 = vdwg.mxu0
        %1496 = vmatprep.subr.bf16.mxu0 %v693
        %1497 = vmatpush1.bf16.msra.mxu0 %v692
        %1498 = vmatprep.subr.bf16.mxu0 %v701
        %1499 = vmatpush1.bf16.msra.mxu0 %v700
        %1500 = vmatprep.subr.bf16.mxu0 0
        %1501 = vmatpush1.bf16.msra.mxu0 0
        %1502 = vmatprep.subr.bf16.mxu0 0
        %1503 = vmatpush1.bf16.msra.mxu0 0
        %1504 = vmatprep.subr.bf16.mxu0 0
        %1505 = vmatpush1.bf16.msra.mxu0 0
        %1506 = vmatprep.subr.bf16.mxu0 0
        %1507 = vmatpush1.bf16.msra.mxu0 0
        %1508 = vmatprep.subr.bf16.mxu0 0
        %1509 = vmatpush1.bf16.msra.mxu0 0
        %1510 = vmatprep.subr.bf16.mxu0 0
        %1511 = vmatpush1.bf16.msra.mxu0 0
        %1512 = vmatprep.subr.bf16.mxu0 0
        %1513 = vmatpush1.bf16.msra.mxu0 0
        %1514 = vmatprep.subr.bf16.mxu0 0
        %1515 = vmatpush1.bf16.msra.mxu0 0
        %1516 = vmatprep.subr.bf16.mxu0 0
        %1517 = vmatpush1.bf16.msra.mxu0 0
        %1518 = vmatprep.subr.bf16.mxu0 0
        %1519 = vmatpush1.bf16.msra.mxu0 0
        %1520 = vmatprep.subr.bf16.mxu0 0
        %1521 = vmatpush1.bf16.msra.mxu0 0
        %1522 = vmatprep.subr.bf16.mxu0 0
        %1523 = vmatpush1.bf16.msra.mxu0 0
        %1524 = vmatprep.subr.bf16.mxu0 0
        %1525 = vmatpush1.bf16.msra.mxu0 0
        %1526 = vmatprep.subr.bf16.mxu0 0
        %1527 = vmatpush1.bf16.msra.mxu0 0
        %1528 = vmatprep.mubr.bf16.mxu0 0
        %1529 = vmatmul.mubr.bf16.gmra.mrb[0].mxu0 %v1371
        %v1530 = vpop.f32.mrb[0].mxu0
        %v1531 = vadd.f32 0.0, %v1530
        %v1532 = vpop.f32.mrb[0].mxu0
        %v1533 = vadd.f32 0.0, %v1532
        %v1534 = vpop.f32.mrb[0].mxu0
        %v1535 = vpop.f32.mrb[0].mxu0
        %1536 = vdwg.mxu0
        %v1537 = vld [vmem:[%s446] sm:$0xff]
        %v1538 = vld [vmem:[%s446 + $0x8] sm:$0xff]
        %v1541 = vlaneseq
        %v1542 = vshrl.u32 %v1541, 7
        %v1543 = vsub.s32 0, %v1542
        %v1544 = vrot.slane %v1537, %v1543
        %v1545 = vlaneseq
        %v1546 = vshrl.u32 %v1545, 7
        %v1547 = vsub.s32 1, %v1546
        %v1548 = vrot.slane %v1537, %v1547
        %v1549 = vlaneseq
        %v1550 = vshrl.u32 %v1549, 7
        %v1551 = vsub.s32 2, %v1550
        %v1552 = vrot.slane %v1537, %v1551
        %v1553 = vlaneseq
        %v1554 = vshrl.u32 %v1553, 7
        %v1555 = vsub.s32 3, %v1554
        %v1556 = vrot.slane %v1537, %v1555
        %v1557 = vlaneseq
        %v1558 = vshrl.u32 %v1557, 7
        %v1559 = vsub.s32 4, %v1558
        %v1560 = vrot.slane %v1537, %v1559
        %v1561 = vlaneseq
        %v1562 = vshrl.u32 %v1561, 7
        %v1563 = vsub.s32 5, %v1562
        %v1564 = vrot.slane %v1537, %v1563
        %v1565 = vlaneseq
        %v1566 = vshrl.u32 %v1565, 7
        %v1567 = vsub.s32 6, %v1566
        %v1568 = vrot.slane %v1537, %v1567
        %v1569 = vlaneseq
        %v1570 = vshrl.u32 %v1569, 7
        %v1571 = vsub.s32 7, %v1570
        %v1572 = vrot.slane %v1537, %v1571
        %v1573 = vlaneseq
        %v1574 = vshrl.u32 %v1573, 7
        %v1575 = vsub.s32 0, %v1574
        %v1576 = vrot.slane %v1538, %v1575
        %v1577 = vlaneseq
        %v1578 = vshrl.u32 %v1577, 7
        %v1579 = vsub.s32 1, %v1578
        %v1580 = vrot.slane %v1538, %v1579
        %v1581 = vlaneseq
        %v1582 = vshrl.u32 %v1581, 7
        %v1583 = vsub.s32 2, %v1582
        %v1584 = vrot.slane %v1538, %v1583
        %v1585 = vlaneseq
        %v1586 = vshrl.u32 %v1585, 7
        %v1587 = vsub.s32 3, %v1586
        %v1588 = vrot.slane %v1538, %v1587
        %v1589 = vlaneseq
        %v1590 = vshrl.u32 %v1589, 7
        %v1591 = vsub.s32 4, %v1590
        %v1592 = vrot.slane %v1538, %v1591
        %v1593 = vlaneseq
        %v1594 = vshrl.u32 %v1593, 7
        %v1595 = vsub.s32 5, %v1594
        %v1596 = vrot.slane %v1538, %v1595
        %v1597 = vlaneseq
        %v1598 = vshrl.u32 %v1597, 7
        %v1599 = vsub.s32 6, %v1598
        %v1600 = vrot.slane %v1538, %v1599
        %v1601 = vlaneseq
        %v1602 = vshrl.u32 %v1601, 7
        %v1603 = vsub.s32 7, %v1602
        %v1604 = vrot.slane %v1538, %v1603
        %v1621 = vmul.f32 %v1241, %v1544
        %v1622 = vmul.f32 %v1243, %v1548
        %v1623 = vmul.f32 %v1282, %v1552
        %v1624 = vmul.f32 %v1284, %v1556
        %v1625 = vmul.f32 %v1323, %v1560
        %v1626 = vmul.f32 %v1325, %v1564
        %v1627 = vmul.f32 %v1364, %v1568
        %v1628 = vmul.f32 %v1366, %v1572
        %v1629 = vmul.f32 %v1408, %v1576
        %v1630 = vmul.f32 %v1410, %v1580
        %v1631 = vmul.f32 %v1449, %v1584
        %v1632 = vmul.f32 %v1451, %v1588
        %v1633 = vmul.f32 %v1490, %v1592
        %v1634 = vmul.f32 %v1492, %v1596
        %v1635 = vmul.f32 %v1531, %v1600
        %v1636 = vmul.f32 %v1533, %v1604
        %v1637 = vld [vmem:[%s452] sm:$0xff]
        %v1638 = vld [vmem:[%s452 + $0x8] sm:$0xff]
        %v1639 = vunpack.c.l.bf16 %v1637
        %v1640 = vunpack.c.h.bf16 %v1637
        %v1641 = vunpack.c.l.bf16 %v1638
        %v1642 = vunpack.c.h.bf16 %v1638
        %v1647 = vlaneseq
        %v1648 = vshrl.u32 %v1647, 7
        %v1649 = vsub.s32 0, %v1648
        %v1650 = vrot.slane %v1639, %v1649
        %v1651 = vlaneseq
        %v1652 = vshrl.u32 %v1651, 7
        %v1653 = vsub.s32 2, %v1652
        %v1654 = vrot.slane %v1639, %v1653
        %v1655 = vlaneseq
        %v1656 = vshrl.u32 %v1655, 7
        %v1657 = vsub.s32 4, %v1656
        %v1658 = vrot.slane %v1639, %v1657
        %v1659 = vlaneseq
        %v1660 = vshrl.u32 %v1659, 7
        %v1661 = vsub.s32 6, %v1660
        %v1662 = vrot.slane %v1639, %v1661
        %v1663 = vlaneseq
        %v1664 = vshrl.u32 %v1663, 7
        %v1665 = vsub.s32 0, %v1664
        %v1666 = vrot.slane %v1640, %v1665
        %v1667 = vlaneseq
        %v1668 = vshrl.u32 %v1667, 7
        %v1669 = vsub.s32 2, %v1668
        %v1670 = vrot.slane %v1640, %v1669
        %v1671 = vlaneseq
        %v1672 = vshrl.u32 %v1671, 7
        %v1673 = vsub.s32 4, %v1672
        %v1674 = vrot.slane %v1640, %v1673
        %v1675 = vlaneseq
        %v1676 = vshrl.u32 %v1675, 7
        %v1677 = vsub.s32 6, %v1676
        %v1678 = vrot.slane %v1640, %v1677
        %v1679 = vlaneseq
        %v1680 = vshrl.u32 %v1679, 7
        %v1681 = vsub.s32 0, %v1680
        %v1682 = vrot.slane %v1641, %v1681
        %v1683 = vlaneseq
        %v1684 = vshrl.u32 %v1683, 7
        %v1685 = vsub.s32 2, %v1684
        %v1686 = vrot.slane %v1641, %v1685
        %v1687 = vlaneseq
        %v1688 = vshrl.u32 %v1687, 7
        %v1689 = vsub.s32 4, %v1688
        %v1690 = vrot.slane %v1641, %v1689
        %v1691 = vlaneseq
        %v1692 = vshrl.u32 %v1691, 7
        %v1693 = vsub.s32 6, %v1692
        %v1694 = vrot.slane %v1641, %v1693
        %v1695 = vlaneseq
        %v1696 = vshrl.u32 %v1695, 7
        %v1697 = vsub.s32 0, %v1696
        %v1698 = vrot.slane %v1642, %v1697
        %v1699 = vlaneseq
        %v1700 = vshrl.u32 %v1699, 7
        %v1701 = vsub.s32 2, %v1700
        %v1702 = vrot.slane %v1642, %v1701
        %v1703 = vlaneseq
        %v1704 = vshrl.u32 %v1703, 7
        %v1705 = vsub.s32 4, %v1704
        %v1706 = vrot.slane %v1642, %v1705
        %v1707 = vlaneseq
        %v1708 = vshrl.u32 %v1707, 7
        %v1709 = vsub.s32 6, %v1708
        %v1710 = vrot.slane %v1642, %v1709
        %v1727 = vlaneseq
        %v1728 = vshrl.u32 %v1727, 7
        %v1729 = vsub.s32 0, %v1728
        %v1730 = vrot.slane %v1650, %v1729
        %v1731 = vlaneseq
        %v1732 = vshrl.u32 %v1731, 7
        %v1733 = vsub.s32 0, %v1732
        %v1734 = vrot.slane %v1654, %v1733
        %v1735 = vlaneseq
        %v1736 = vshrl.u32 %v1735, 7
        %v1737 = vsub.s32 0, %v1736
        %v1738 = vrot.slane %v1658, %v1737
        %v1739 = vlaneseq
        %v1740 = vshrl.u32 %v1739, 7
        %v1741 = vsub.s32 0, %v1740
        %v1742 = vrot.slane %v1662, %v1741
        %v1743 = vlaneseq
        %v1744 = vshrl.u32 %v1743, 7
        %v1745 = vsub.s32 0, %v1744
        %v1746 = vrot.slane %v1666, %v1745
        %v1747 = vlaneseq
        %v1748 = vshrl.u32 %v1747, 7
        %v1749 = vsub.s32 0, %v1748
        %v1750 = vrot.slane %v1670, %v1749
        %v1751 = vlaneseq
        %v1752 = vshrl.u32 %v1751, 7
        %v1753 = vsub.s32 0, %v1752
        %v1754 = vrot.slane %v1674, %v1753
        %v1755 = vlaneseq
        %v1756 = vshrl.u32 %v1755, 7
        %v1757 = vsub.s32 0, %v1756
        %v1758 = vrot.slane %v1678, %v1757
        %v1759 = vlaneseq
        %v1760 = vshrl.u32 %v1759, 7
        %v1761 = vsub.s32 0, %v1760
        %v1762 = vrot.slane %v1682, %v1761
        %v1763 = vlaneseq
        %v1764 = vshrl.u32 %v1763, 7
        %v1765 = vsub.s32 0, %v1764
        %v1766 = vrot.slane %v1686, %v1765
        %v1767 = vlaneseq
        %v1768 = vshrl.u32 %v1767, 7
        %v1769 = vsub.s32 0, %v1768
        %v1770 = vrot.slane %v1690, %v1769
        %v1771 = vlaneseq
        %v1772 = vshrl.u32 %v1771, 7
        %v1773 = vsub.s32 0, %v1772
        %v1774 = vrot.slane %v1694, %v1773
        %v1775 = vlaneseq
        %v1776 = vshrl.u32 %v1775, 7
        %v1777 = vsub.s32 0, %v1776
        %v1778 = vrot.slane %v1698, %v1777
        %v1779 = vlaneseq
        %v1780 = vshrl.u32 %v1779, 7
        %v1781 = vsub.s32 0, %v1780
        %v1782 = vrot.slane %v1702, %v1781
        %v1783 = vlaneseq
        %v1784 = vshrl.u32 %v1783, 7
        %v1785 = vsub.s32 0, %v1784
        %v1786 = vrot.slane %v1706, %v1785
        %v1787 = vlaneseq
        %v1788 = vshrl.u32 %v1787, 7
        %v1789 = vsub.s32 0, %v1788
        %v1790 = vrot.slane %v1710, %v1789
        %v1791 = vadd.f32 %v1621, %v1730
        %v1792 = vadd.f32 %v1622, %v1734
        %v1793 = vadd.f32 %v1623, %v1738
        %v1794 = vadd.f32 %v1624, %v1742
        %v1795 = vadd.f32 %v1625, %v1746
        %v1796 = vadd.f32 %v1626, %v1750
        %v1797 = vadd.f32 %v1627, %v1754
        %v1798 = vadd.f32 %v1628, %v1758
        %v1799 = vadd.f32 %v1629, %v1762
        %v1800 = vadd.f32 %v1630, %v1766
        %v1801 = vadd.f32 %v1631, %v1770
        %v1802 = vadd.f32 %v1632, %v1774
        %v1803 = vadd.f32 %v1633, %v1778
        %v1804 = vadd.f32 %v1634, %v1782
        %v1805 = vadd.f32 %v1635, %v1786
        %v1806 = vadd.f32 %v1636, %v1790
        %v1823 = vcombine.low %v1791, %v1792
        %v1824 = vcombine.low %v1793, %v1794
        %v1826 = vunpack.c.l.s4 1983009808
        %v1827 = vunpack.c.0.s8 %v1826
        %v1828 = vlaneseq
        %v1829 = vshrl.u32 %v1828, 7
        %v1830 = vsub.s32 %v1827, %v1829
        %v1831 = vrot.slane %v1823, %v1830
        %v1833 = vunpack.c.l.s4 1983009808
        %v1834 = vunpack.c.0.s8 %v1833
        %v1835 = vlaneseq
        %v1836 = vshrl.u32 %v1835, 7
        %v1837 = vsub.s32 %v1834, %v1836
        %v1838 = vrot.slane %v1824, %v1837
        %v1839 = vcombine.low %v1831, %v1838
        %v1840 = vcombine.low %v1795, %v1796
        %v1841 = vcombine.low %v1797, %v1798
        %v1843 = vunpack.c.l.s4 1983009808
        %v1844 = vunpack.c.0.s8 %v1843
        %v1845 = vlaneseq
        %v1846 = vshrl.u32 %v1845, 7
        %v1847 = vsub.s32 %v1844, %v1846
        %v1848 = vrot.slane %v1840, %v1847
        %v1850 = vunpack.c.l.s4 1983009808
        %v1851 = vunpack.c.0.s8 %v1850
        %v1852 = vlaneseq
        %v1853 = vshrl.u32 %v1852, 7
        %v1854 = vsub.s32 %v1851, %v1853
        %v1855 = vrot.slane %v1841, %v1854
        %v1856 = vcombine.low %v1848, %v1855
        %v1857 = vcombine.low %v1799, %v1800
        %v1858 = vcombine.low %v1801, %v1802
        %v1860 = vunpack.c.l.s4 1983009808
        %v1861 = vunpack.c.0.s8 %v1860
        %v1862 = vlaneseq
        %v1863 = vshrl.u32 %v1862, 7
        %v1864 = vsub.s32 %v1861, %v1863
        %v1865 = vrot.slane %v1857, %v1864
        %v1867 = vunpack.c.l.s4 1983009808
        %v1868 = vunpack.c.0.s8 %v1867
        %v1869 = vlaneseq
        %v1870 = vshrl.u32 %v1869, 7
        %v1871 = vsub.s32 %v1868, %v1870
        %v1872 = vrot.slane %v1858, %v1871
        %v1873 = vcombine.low %v1865, %v1872
        %v1874 = vcombine.low %v1803, %v1804
        %v1875 = vcombine.low %v1805, %v1806
        %v1877 = vunpack.c.l.s4 1983009808
        %v1878 = vunpack.c.0.s8 %v1877
        %v1879 = vlaneseq
        %v1880 = vshrl.u32 %v1879, 7
        %v1881 = vsub.s32 %v1878, %v1880
        %v1882 = vrot.slane %v1874, %v1881
        %v1884 = vunpack.c.l.s4 1983009808
        %v1885 = vunpack.c.0.s8 %v1884
        %v1886 = vlaneseq
        %v1887 = vshrl.u32 %v1886, 7
        %v1888 = vsub.s32 %v1885, %v1887
        %v1889 = vrot.slane %v1875, %v1888
        %v1890 = vcombine.low %v1882, %v1889
        %1895 = vst [vmem:[%s411] sm:$0xff] %v1839
        %1896 = vst [vmem:[%s411 + $0x8] sm:$0xff] %v1856
        %1897 = vst [vmem:[%s411 + $0x10] sm:$0xff] %v1873
        %1898 = vst [vmem:[%s411 + $0x18] sm:$0xff] %v1890
        %s1899 = sand.u32 %s238, 1
        %s1900 = scalar_lea.sflag [#allocation3], %s1899
        %s1901 = sand.u32 %s238, 1
        %s1902 = smul.addr %s1901, 32
        %s1903 = scalar_lea.vmem [#allocation2], %s1902
        // Predicated region
        $region53: #{tpu_custom_call.1} parent=51 // pred_check
          %p1904 = pneg %p248
        $region54: #{tpu_custom_call.1} parent=51 // pred_check_branch
          %1906 = sbr.rel (%p1904) target = $region56
        $region55: #{tpu_custom_call.1} parent=51 // pred_region
          %s1907 = smul.u32 2, %s22
          %s1909 = ssub.s32 512, 512
          %1910 = vsyncadd %s1900, %s1909
          %s1911 = smul.addr %s1907, 8
          %s1912 = smul.addr %s1911, 32
          %s1913 = scalar_lea.hbm %s8, %s1912
          %s1914 = sshll.u32 %s1903, 4
          %s1915 = int_to_ptr.vmem [resolvable:$true] %s1914
          %1920 = dma.vmem_to_hbm [thread:$0]  %s1915, 512, %s1913, %s1900, 256, 256, 16
        $region56: #{tpu_custom_call.1} parent=51 // pred_fallthru
          _
      $region52: #{tpu_custom_call.1} parent=5 // pred_fallthru
        _
      %p1921 = scmp.le.s32.totalorder 2, %s17
      // Predicated region
      $region57: #{tpu_custom_call.1} parent=5 // pred_check
        %p1922 = pneg %p1921
      $region58: #{tpu_custom_call.1} parent=5 // pred_check_branch
        %1924 = sbr.rel (%p1922) target = $region60
      $region59: #{tpu_custom_call.1} parent=5 // pred_region
        %s1925 = ssub.s32 %s17, 2
        // Predicated region
        $region61: #{tpu_custom_call.1} parent=59 // pred_check
          %p1926 = pneg %p254
        $region62: #{tpu_custom_call.1} parent=59 // pred_check_branch
          %1928 = sbr.rel (%p1926) target = $region64
        $region63: #{tpu_custom_call.1} parent=59 // pred_region
          %s1929 = sand.u32 %s239, 1
          %s1930 = scalar_lea.sflag [#allocation3], %s1929
          %s1931 = sand.u32 %s239, 1
          %s1932 = smul.addr %s1931, 32
          %s1933 = scalar_lea.vmem [#allocation2], %s1932
          %1934 = dma.done %s1930, 512
        $region64: #{tpu_custom_call.1} parent=59 // pred_fallthru
          _
      $region60: #{tpu_custom_call.1} parent=5 // pred_fallthru
        _
    $region6: #{tpu_custom_call.1} parent=1 // loop_footer
      %s21 = sadd.s32 1, %s17
    $region7: #{tpu_custom_call.1} parent=1 // loop_footer_branch
      %16 = sbr.rel target = $region3
    $region8: #{tpu_custom_call.1} parent=1 // loop_exit
      _
    %1935 = vsyncpa [#allocation3], 1
    %s1936 = scalar_lea.sflag [#allocation3], 1
    %1937 = vsyncpa %s1936, 1

</llo_original>
